<compile_context>
chip_gen: v7x
topology: tpu7x:2x2x1
jax: 0.10.0
libtpu: 0.0.40
codegen_flags: <defaults>
</compile_context>

<pallas_src>
import functools

import jax
import jax.numpy as jnp
from jax.experimental import pallas as pl
from jax.experimental.pallas import tpu as pltpu

GIN_EPS = 0.0        # GINConv default eps (train_eps=False)
BN_EPS = 1e-5        # BatchNorm1d default eps
LANE = 128           # TPU lane width (pad node and channel dims to this)


def _round_up(v, m):
    return ((v + m - 1) // m) * m


# ---------------------------------------------------------------------------
# Feature probe: is pipeline_mode=pl.Buffered(1) accepted by this JAX/Mosaic?
# ---------------------------------------------------------------------------
@functools.lru_cache(maxsize=None)
def _single_buffer_ok():
    def _probe_kernel(x_ref, o_ref):
        o_ref[...] = x_ref[...] + 1.0

    try:
        f = pl.pallas_call(
            _probe_kernel,
            out_shape=jax.ShapeDtypeStruct((8, 128), jnp.float32),
            grid=(1,),
            in_specs=[pl.BlockSpec((8, 128), lambda i: (0, 0),
                                   pipeline_mode=pl.Buffered(1))],
            out_specs=pl.BlockSpec((8, 128), lambda i: (0, 0)),
        )
        jax.block_until_ready(f(jnp.zeros((8, 128), jnp.float32)))
        return True
    except Exception:
        return False


# ---------------------------------------------------------------------------
# Per-generation VMEM budget for the fused call
# ---------------------------------------------------------------------------
def _pick_vmem_limit(n_pad, cin_pad, hid_pad, cout_pad, single_buffer):
    buf = 1 if single_buffer else 2
    need = (
        buf * 2 * n_pad * n_pad                       # bf16 adjacency (A + I)
        + buf * 2 * n_pad * cin_pad                   # bf16 node features
        + 2 * 4 * n_pad * cout_pad                    # f32 output, dbl-buffered
        + 2 * 2 * (cin_pad * hid_pad + 2 * hid_pad * hid_pad
                   + hid_pad * cout_pad)              # bf16 weights, dbl-buffered
        + 2 * 4 * (6 * hid_pad + cout_pad)            # f32 scale/shift/bias rows
        + 6 * 4 * n_pad * max(hid_pad, cin_pad, cout_pad)  # live activation temps
        + (4 << 20)                                   # compiler scratch headroom
    )
    try:
        cap = int(pltpu.get_tpu_info().vmem_capacity_bytes)   # 64 MiB v7x, 128 MiB v5e/v6e
    except Exception:
        cap = 64 << 20                                         # conservative fallback
    return int(min(max(need, 32 << 20), (cap * 7) // 8))


# ---------------------------------------------------------------------------
# Fused kernel: all GIN layers + final linear + (masked) log_softmax
# ---------------------------------------------------------------------------
def gin_fused_kernel(x_ref, a_ref,
                     w1_ref, s1_ref, t1_ref,
                     w2_ref, s2_ref, t2_ref,
                     w3_ref, s3_ref, t3_ref,
                     w4_ref, b4_ref,
                     o_ref, *, num_middle, out_valid, if_auc):

    def gin_sublayer(x, w, s, t):
        # h = (A + (1+eps)I) @ x : the GIN self term is folded into A at prep
        # time (eps == 0 default).  bf16 x bf16 -> f32 on the MXU; A is read
        # from VMEM per use (no whole-kernel live range -> low vreg pressure).
        h = jnp.dot(a_ref[...], x, preferred_element_type=jnp.float32)
        # Linear (bias folded into BN shift): single-pass bf16 MXU matmul.
        y = jnp.dot(h.astype(jnp.bfloat16), w,
                    preferred_element_type=jnp.float32)
        y = y * s + t                           # eval-mode BatchNorm, in f32
        # ReLU, then cast back to bf16 once per layer (resident activation).
        return jnp.maximum(y, 0.0).astype(jnp.bfloat16)

    # conv[0] = GINConv(firstmlp); eval-mode dropout is identity.
    x = gin_sublayer(x_ref[...], w1_ref[...], s1_ref[...], t1_ref[...])

    # conv[1..L-2] = GINConv(self.mlp): parameters are SHARED across these
    # layers — load them once, outside the unrolled loop.
    # TODO(synk): for deep GINs switch to lax.fori_loop to bound code size.
    w2 = w2_ref[...]
    s2 = s2_ref[...]
    t2 = t2_ref[...]
    for _ in range(num_middle):
        x = gin_sublayer(x, w2, s2, t2)

    # conv[L-1] = GINConv(lastmlp): agg -> Lin -> BN -> ReLU -> Lin.
    h = gin_sublayer(x, w3_ref[...], s3_ref[...], t3_ref[...])
    y = jnp.dot(h, w4_ref[...], preferred_element_type=jnp.float32) + b4_ref[...]

    if if_auc:
        o_ref[...] = y.astype(o_ref.dtype)
    else:
        # Row-wise log_softmax over the *valid* (un-padded) output columns.
        col = jax.lax.broadcasted_iota(jnp.int32, y.shape, 1)
        valid = col < out_valid
        masked = jnp.where(valid, y, jnp.float32(-1e30))
        m = jnp.max(masked, axis=-1, keepdims=True)
        shifted = y - m
        e = jnp.where(valid, jnp.exp(shifted), 0.0)
        lse = jnp.log(jnp.sum(e, axis=-1, keepdims=True))
        o_ref[...] = (shifted - lse).astype(o_ref.dtype)


# ---------------------------------------------------------------------------
# Jitted implementation: pad x, build specs, single pallas_call
# ---------------------------------------------------------------------------
@functools.partial(
    jax.jit,
    static_argnames=("num_layers", "if_auc", "out_channels",
                     "single_buffer", "vmem_limit"))
def _gin_forward_impl(x, a_prep, params, *, num_layers, if_auc, out_channels,
                      single_buffer, vmem_limit):
    n, cin = x.shape
    n_pad = a_prep.shape[0]
    cin_pad = params["w1"].shape[0]
    hid_pad = params["w1"].shape[1]
    cout_pad = params["w4"].shape[1]

    # Zero-pad node features and cast to bf16.  Padded source columns of the
    # prepared A are zero (apart from the diagonal), so padded (fake) nodes
    # never contribute to real nodes' aggregation.
    x_p = jnp.pad(x, ((0, n_pad - n), (0, cin_pad - cin))).astype(jnp.bfloat16)

    kernel = functools.partial(
        gin_fused_kernel,
        num_middle=num_layers - 2,
        out_valid=out_channels,
        if_auc=if_auc,
    )

    def full(shape, single=False):
        # With grid=(1,) there is nothing to pipeline: request a single buffer
        # for the VMEM-dominant operands (A, x) when the runtime supports it.
        if single and single_buffer:
            return pl.BlockSpec(shape, lambda i: (0, 0),
                                pipeline_mode=pl.Buffered(1))
        return pl.BlockSpec(shape, lambda i: (0, 0))

    # Output kept f32 for log-prob fidelity; it is small relative to the A
    # stream (review: bf16 writeback would be a minor win only).
    out_pad = pl.pallas_call(
        kernel,
        out_shape=jax.ShapeDtypeStruct((n_pad, cout_pad), jnp.float32),
        grid_spec=pltpu.PrefetchScalarGridSpec(
            num_scalar_prefetch=0,
            grid=(1,),
            in_specs=[
                full((n_pad, cin_pad), single=True),   # x   (bf16)
                full((n_pad, n_pad), single=True),     # A+I (bf16)
                full((cin_pad, hid_pad)),              # W1  (bf16)
                full((1, hid_pad)),                    # BN1 scale (f32)
                full((1, hid_pad)),                    # BN1 shift (+bias, f32)
                full((hid_pad, hid_pad)),              # W2 shared middle (bf16)
                full((1, hid_pad)),                    # BN2 scale
                full((1, hid_pad)),                    # BN2 shift
                full((hid_pad, hid_pad)),              # W3 (bf16)
                full((1, hid_pad)),                    # BN3 scale
                full((1, hid_pad)),                    # BN3 shift
                full((hid_pad, cout_pad)),             # W4 (bf16)
                full((1, cout_pad)),                   # b4 (f32)
            ],
            out_specs=full((n_pad, cout_pad)),
        ),
        compiler_params=pltpu.CompilerParams(
            dimension_semantics=("arbitrary",),
            vmem_limit_bytes=vmem_limit,
        ),
    )(x_p, a_prep,
      params["w1"], params["scale1"], params["shift1"],
      params["w2"], params["scale2"], params["shift2"],
      params["w3"], params["scale3"], params["shift3"],
      params["w4"], params["b4"])

    return out_pad[:n, :out_channels]


def gin_forward(x, a_prep, params, *, num_layers=3, if_auc=False,
                out_channels=8):
    """Public entry point (not jitted itself): probes Buffered(1) support and
    picks a per-generation VMEM budget, then calls the jitted fused kernel."""
    assert a_prep.shape[0] == a_prep.shape[1], "prepared adjacency must be square"
    assert x.shape[0] <= a_prep.shape[0]
    single_buffer = _single_buffer_ok()
    vmem_limit = _pick_vmem_limit(
        a_prep.shape[0], params["w1"].shape[0], params["w1"].shape[1],
        params["w4"].shape[1], single_buffer)
    return _gin_forward_impl(
        x, a_prep, params,
        num_layers=num_layers, if_auc=if_auc, out_channels=out_channels,
        single_buffer=single_buffer, vmem_limit=vmem_limit)


# ---------------------------------------------------------------------------
# One-time input preparation (kept persistent across forward passes)
# ---------------------------------------------------------------------------
def prepare_adjacency(a, eps=GIN_EPS):
    """Pad dense adjacency to (n_pad, n_pad) with n_pad a multiple of 128,
    fold in the GIN self term (1+eps)*I (eps = 0 default, so entries stay
    exactly representable in bf16), and cast to bf16.  Do this ONCE and reuse
    the result across forwards (avoids an N^2 HBM round trip per call)."""
    n = a.shape[0]
    n_pad = _round_up(n, LANE)
    a_p = jnp.pad(a, ((0, n_pad - n), (0, n_pad - n)))
    a_p = a_p + (1.0 + eps) * jnp.eye(n_pad, dtype=a_p.dtype)
    return a_p.astype(jnp.bfloat16)


# ---------------------------------------------------------------------------
# Parameter construction (deterministic, shapes from GIN.__init__)
# ---------------------------------------------------------------------------
def make_raw_params(key, in_channels, hidden_channels, out_channels):
    """Raw, un-fused parameters (PyTorch-layout analog, W stored (cin, cout))."""
    ks = jax.random.split(key, 12)

    def lin(kw, kb, cin, cout):
        w = jax.random.normal(kw, (cin, cout), jnp.float32) * 0.1
        b = jax.random.normal(kb, (cout,), jnp.float32) * 0.05
        return w, b

    def bn(kg, kb, c):
        gamma = 1.0 + 0.1 * jax.random.normal(kg, (c,), jnp.float32)
        beta = 0.05 * jax.random.normal(kb, (c,), jnp.float32)
        run_mean = 0.1 * jax.random.normal(jax.random.fold_in(kg, 7), (c,),
                                           jnp.float32)
        run_var = 1.0 + 0.1 * jax.random.uniform(jax.random.fold_in(kb, 7),
                                                 (c,), jnp.float32)
        return gamma, beta, run_mean, run_var

    raw = {}
    raw["w1"], raw["b1"] = lin(ks[0], ks[1], in_channels, hidden_channels)
    raw["bn1"] = bn(ks[2], ks[3], hidden_channels)
    raw["w2"], raw["b2"] = lin(ks[4], ks[5], hidden_channels, hidden_channels)
    raw["bn2"] = bn(ks[6], ks[7], hidden_channels)
    raw["w3"], raw["b3"] = lin(ks[8], ks[9], hidden_channels, hidden_channels)
    raw["bn3"] = bn(ks[10], ks[11], hidden_channels)
    raw["w4"], raw["b4"] = lin(jax.random.fold_in(key, 100),
                               jax.random.fold_in(key, 101),
                               hidden_channels, out_channels)
    return raw


def fold_and_pad_params(raw, in_channels, hidden_channels, out_channels):
    """Fold eval-mode BN (+ linear bias) into f32 (scale, shift), pad all
    channel dims to 128, and store weight matrices in bf16 (single-pass MXU)."""
    cin_pad = _round_up(in_channels, LANE)
    hid_pad = _round_up(hidden_channels, LANE)
    cout_pad = _round_up(out_channels, LANE)

    def pad_w(w, r, c):
        return jnp.pad(w, ((0, r - w.shape[0]),
                           (0, c - w.shape[1]))).astype(jnp.bfloat16)

    def pad_row(v, c):
        return jnp.pad(v[None, :], ((0, 0), (0, c - v.shape[0])))

    def fold(b, bn):
        gamma, beta, mean, var = bn
        scale = gamma / jnp.sqrt(var + BN_EPS)
        shift = (b - mean) * scale + beta      # linear bias folded in
        return scale, shift

    p = {}
    s1, t1 = fold(raw["b1"], raw["bn1"])
    s2, t2 = fold(raw["b2"], raw["bn2"])
    s3, t3 = fold(raw["b3"], raw["bn3"])
    p["w1"] = pad_w(raw["w1"], cin_pad, hid_pad)
    p["scale1"], p["shift1"] = pad_row(s1, hid_pad), pad_row(t1, hid_pad)
    p["w2"] = pad_w(raw["w2"], hid_pad, hid_pad)
    p["scale2"], p["shift2"] = pad_row(s2, hid_pad), pad_row(t2, hid_pad)
    p["w3"] = pad_w(raw["w3"], hid_pad, hid_pad)
    p["scale3"], p["shift3"] = pad_row(s3, hid_pad), pad_row(t3, hid_pad)
    p["w4"] = pad_w(raw["w4"], hid_pad, cout_pad)
    p["b4"] = pad_row(raw["b4"], cout_pad)
    return p


# ---------------------------------------------------------------------------
# Pure-JAX f32 reference (mirrors the PyTorch eval-mode forward)
# ---------------------------------------------------------------------------
def gin_reference(x, a, raw, *, num_layers, if_auc):
    def sub(x, w, b, bn):
        gamma, beta, mean, var = bn
        h = x + a @ x                              # (1+eps)*x + A@x, eps=0
        y = h @ w + b
        y = (y - mean) / jnp.sqrt(var + BN_EPS) * gamma + beta
        return jnp.maximum(y, 0.0)

    x = sub(x, raw["w1"], raw["b1"], raw["bn1"])
    for _ in range(num_layers - 2):
        x = sub(x, raw["w2"], raw["b2"], raw["bn2"])
    h = sub(x, raw["w3"], raw["b3"], raw["bn3"])
    y = h @ raw["w4"] + raw["b4"]
    if if_auc:
        return y
    return jax.nn.log_softmax(y, axis=-1)


# ---------------------------------------------------------------------------
if __name__ == "__main__":
    key = jax.random.PRNGKey(0)
    k_x, k_a, k_p = jax.random.split(key, 3)

    N = 200               # number of graph nodes (exercises padding to 256)
    IN_CH = 16
    HIDDEN = 32
    OUT_CH = 8
    NUM_LAYERS = 3
    IF_AUC = False

    # Node features.
    x = jax.random.normal(k_x, (N, IN_CH), jnp.float32)

    # Dense random adjacency (row = destination, col = source), self loops
    # removed; GINConv's self term is added via the folded identity in
    # prepare_adjacency.
    a = (jax.random.uniform(k_a, (N, N)) < 0.03).astype(jnp.float32)
    a = a * (1.0 - jnp.eye(N, dtype=jnp.float32))

    raw = make_raw_params(k_p, IN_CH, HIDDEN, OUT_CH)
    params = fold_and_pad_params(raw, IN_CH, HIDDEN, OUT_CH)
    a_prep = prepare_adjacency(a)       # one-time, persistent across forwards

    out = gin_forward(x, a_prep, params, num_layers=NUM_LAYERS,
                      if_auc=IF_AUC, out_channels=OUT_CH)
    out = jax.block_until_ready(out)

    assert out.shape == (N, OUT_CH), out.shape
    assert bool(jnp.all(jnp.isfinite(out)))

    # Compare against an f32 JAX reference.  Tolerance covers the deliberate
    # bf16 activation / weight quantization compounding over 3 layers.
    ref = gin_reference(x, a, raw, num_layers=NUM_LAYERS, if_auc=IF_AUC)
    max_err = float(jnp.max(jnp.abs(out - ref)))
    assert bool(jnp.allclose(out, ref, atol=2e-1, rtol=5e-2)), max_err

    if not IF_AUC:
        # log_softmax rows must sum to ~1 in probability space, and the
        # probabilities themselves should track the f32 reference.
        row_sums = jnp.sum(jnp.exp(out), axis=-1)
        assert bool(jnp.allclose(row_sums, 1.0, atol=1e-3))
        assert bool(jnp.allclose(jnp.exp(out), jnp.exp(ref), atol=5e-2))

    print("KERNEL_OK")
</pallas_src>

<mosaic_0001>
module attributes {stable_mosaic.version = 11 : i64} {
  func.func @_probe_kernel(%arg0: i32, %arg1: memref<8x128xf32, #tpu.memory_space<vmem>>, %arg2: memref<8x128xf32, #tpu.memory_space<vmem>>) attributes {dimension_semantics = [#tpu.dimension_semantics<arbitrary>], iteration_bounds = array<i64: 1>, scalar_prefetch = 0 : i64, scratch_operands = 0 : i64, tpu.core_type = #tpu.core_type<tc>, window_params = [{pipeline_mode = #tpu.pipeline_mode<synchronous>, transform_indices = @transform_0, window_bounds = array<i64: 8, 128>}, {pipeline_mode = #tpu.pipeline_mode<synchronous>, transform_indices = @transform_1, window_bounds = array<i64: 8, 128>}]} {
    %c0 = arith.constant 0 : index
    %c0_0 = arith.constant 0 : index
    %0 = vector.load %arg1[%c0, %c0_0] : memref<8x128xf32, #tpu.memory_space<vmem>>, vector<8x128xf32>
    %cst = arith.constant 1.000000e+00 : f32
    %1 = vector.broadcast %cst : f32 to vector<8x128xf32>
    %2 = arith.addf %0, %1 : vector<8x128xf32>
    %c0_1 = arith.constant 0 : index
    %c0_2 = arith.constant 0 : index
    %3 = vector.load %arg2[%c0_1, %c0_2] : memref<8x128xf32, #tpu.memory_space<vmem>>, vector<8x128xf32>
    tpu.vector_store %arg2[%c0_1, %c0_2], %2 {strides = array<i32>} : memref<8x128xf32, #tpu.memory_space<vmem>>, vector<8x128xf32>,
    return
  }
  func.func @transform_0(%arg0: i32) -> (i32, i32) {
    %c0_i32 = arith.constant 0 : i32
    %c0_i32_0 = arith.constant 0 : i32
    %c0_i32_1 = arith.constant 0 : i32
    return %c0_i32, %c0_i32_0 : i32, i32
  }
  func.func @transform_1(%arg0: i32) -> (i32, i32) {
    %c0_i32 = arith.constant 0 : i32
    %c0_i32_0 = arith.constant 0 : i32
    %c0_i32_1 = arith.constant 0 : i32
    return %c0_i32, %c0_i32_0 : i32, i32
  }
}

module attributes {stable_mosaic.version = 11 : i64} {
  func.func @gin_fused_kernel(%arg0: i32, %arg1: memref<256x128xbf16, #tpu.memory_space<vmem>>, %arg2: memref<256x256xbf16, #tpu.memory_space<vmem>>, %arg3: memref<128x128xbf16, #tpu.memory_space<vmem>>, %arg4: memref<1x128xf32, #tpu.memory_space<vmem>>, %arg5: memref<1x128xf32, #tpu.memory_space<vmem>>, %arg6: memref<128x128xbf16, #tpu.memory_space<vmem>>, %arg7: memref<1x128xf32, #tpu.memory_space<vmem>>, %arg8: memref<1x128xf32, #tpu.memory_space<vmem>>, %arg9: memref<128x128xbf16, #tpu.memory_space<vmem>>, %arg10: memref<1x128xf32, #tpu.memory_space<vmem>>, %arg11: memref<1x128xf32, #tpu.memory_space<vmem>>, %arg12: memref<128x128xbf16, #tpu.memory_space<vmem>>, %arg13: memref<1x128xf32, #tpu.memory_space<vmem>>, %arg14: memref<256x128xf32, #tpu.memory_space<vmem>>) attributes {dimension_semantics = [#tpu.dimension_semantics<arbitrary>], iteration_bounds = array<i64: 1>, scalar_prefetch = 0 : i64, scratch_operands = 0 : i64, tpu.core_type = #tpu.core_type<tc>, window_params = [{pipeline_mode = #tpu.pipeline_mode<synchronous>, transform_indices = @transform_0, window_bounds = array<i64: 256, 128>}, {pipeline_mode = #tpu.pipeline_mode<synchronous>, transform_indices = @transform_1, window_bounds = array<i64: 256, 256>}, {pipeline_mode = #tpu.pipeline_mode<synchronous>, transform_indices = @transform_2, window_bounds = array<i64: 128, 128>}, {pipeline_mode = #tpu.pipeline_mode<synchronous>, transform_indices = @transform_3, window_bounds = array<i64: 1, 128>}, {pipeline_mode = #tpu.pipeline_mode<synchronous>, transform_indices = @transform_4, window_bounds = array<i64: 1, 128>}, {pipeline_mode = #tpu.pipeline_mode<synchronous>, transform_indices = @transform_5, window_bounds = array<i64: 128, 128>}, {pipeline_mode = #tpu.pipeline_mode<synchronous>, transform_indices = @transform_6, window_bounds = array<i64: 1, 128>}, {pipeline_mode = #tpu.pipeline_mode<synchronous>, transform_indices = @transform_7, window_bounds = array<i64: 1, 128>}, {pipeline_mode = #tpu.pipeline_mode<synchronous>, transform_indices = @transform_8, window_bounds = array<i64: 128, 128>}, {pipeline_mode = #tpu.pipeline_mode<synchronous>, transform_indices = @transform_9, window_bounds = array<i64: 1, 128>}, {pipeline_mode = #tpu.pipeline_mode<synchronous>, transform_indices = @transform_10, window_bounds = array<i64: 1, 128>}, {pipeline_mode = #tpu.pipeline_mode<synchronous>, transform_indices = @transform_11, window_bounds = array<i64: 128, 128>}, {pipeline_mode = #tpu.pipeline_mode<synchronous>, transform_indices = @transform_12, window_bounds = array<i64: 1, 128>}, {pipeline_mode = #tpu.pipeline_mode<synchronous>, transform_indices = @transform_13, window_bounds = array<i64: 256, 128>}]} {
    %c0 = arith.constant 0 : index
    %c0_0 = arith.constant 0 : index
    %0 = vector.load %arg1[%c0, %c0_0] : memref<256x128xbf16, #tpu.memory_space<vmem>>, vector<256x128xbf16>
    %c0_1 = arith.constant 0 : index
    %c0_2 = arith.constant 0 : index
    %1 = vector.load %arg3[%c0_1, %c0_2] : memref<128x128xbf16, #tpu.memory_space<vmem>>, vector<128x128xbf16>
    %c0_3 = arith.constant 0 : index
    %c0_4 = arith.constant 0 : index
    %2 = vector.load %arg4[%c0_3, %c0_4] : memref<1x128xf32, #tpu.memory_space<vmem>>, vector<1x128xf32>
    %c0_5 = arith.constant 0 : index
    %c0_6 = arith.constant 0 : index
    %3 = vector.load %arg5[%c0_5, %c0_6] : memref<1x128xf32, #tpu.memory_space<vmem>>, vector<1x128xf32>
    %c0_7 = arith.constant 0 : index
    %c0_8 = arith.constant 0 : index
    %4 = vector.load %arg2[%c0_7, %c0_8] : memref<256x256xbf16, #tpu.memory_space<vmem>>, vector<256x256xbf16>
    %cst = arith.constant dense<0.000000e+00> : vector<256x128xf32>
    %5 = tpu.matmul %4, %0, %cst {dimension_numbers = #tpu.dot_dimension_numbers<[1], [0], [0], [1], [0, 0, 1, 1], [], []>} : vector<256x256xbf16>, vector<256x128xbf16>, vector<256x128xf32> -> vector<256x128xf32>
    %6 = arith.truncf %5 : vector<256x128xf32> to vector<256x128xbf16>
    %cst_9 = arith.constant dense<0.000000e+00> : vector<256x128xf32>
    %7 = tpu.matmul %6, %1, %cst_9 {dimension_numbers = #tpu.dot_dimension_numbers<[1], [0], [0], [1], [0, 0, 1, 1], [], []>} : vector<256x128xbf16>, vector<128x128xbf16>, vector<256x128xf32> -> vector<256x128xf32>
    %8 = vector.broadcast %2 : vector<1x128xf32> to vector<256x128xf32>
    %9 = arith.mulf %7, %8 : vector<256x128xf32>
    %10 = vector.broadcast %3 : vector<1x128xf32> to vector<256x128xf32>
    %11 = arith.addf %9, %10 : vector<256x128xf32>
    %cst_10 = arith.constant 0.000000e+00 : f32
    %12 = vector.broadcast %cst_10 : f32 to vector<256x128xf32>
    %13 = arith.maximumf %11, %12 : vector<256x128xf32>
    %14 = arith.truncf %13 : vector<256x128xf32> to vector<256x128xbf16>
    %c0_11 = arith.constant 0 : index
    %c0_12 = arith.constant 0 : index
    %15 = vector.load %arg6[%c0_11, %c0_12] : memref<128x128xbf16, #tpu.memory_space<vmem>>, vector<128x128xbf16>
    %c0_13 = arith.constant 0 : index
    %c0_14 = arith.constant 0 : index
    %16 = vector.load %arg7[%c0_13, %c0_14] : memref<1x128xf32, #tpu.memory_space<vmem>>, vector<1x128xf32>
    %c0_15 = arith.constant 0 : index
    %c0_16 = arith.constant 0 : index
    %17 = vector.load %arg8[%c0_15, %c0_16] : memref<1x128xf32, #tpu.memory_space<vmem>>, vector<1x128xf32>
    %c0_17 = arith.constant 0 : index
    %c0_18 = arith.constant 0 : index
    %18 = vector.load %arg2[%c0_17, %c0_18] : memref<256x256xbf16, #tpu.memory_space<vmem>>, vector<256x256xbf16>
    %cst_19 = arith.constant dense<0.000000e+00> : vector<256x128xf32>
    %19 = tpu.matmul %18, %14, %cst_19 {dimension_numbers = #tpu.dot_dimension_numbers<[1], [0], [0], [1], [0, 0, 1, 1], [], []>} : vector<256x256xbf16>, vector<256x128xbf16>, vector<256x128xf32> -> vector<256x128xf32>
    %20 = arith.truncf %19 : vector<256x128xf32> to vector<256x128xbf16>
    %cst_20 = arith.constant dense<0.000000e+00> : vector<256x128xf32>
    %21 = tpu.matmul %20, %15, %cst_20 {dimension_numbers = #tpu.dot_dimension_numbers<[1], [0], [0], [1], [0, 0, 1, 1], [], []>} : vector<256x128xbf16>, vector<128x128xbf16>, vector<256x128xf32> -> vector<256x128xf32>
    %22 = vector.broadcast %16 : vector<1x128xf32> to vector<256x128xf32>
    %23 = arith.mulf %21, %22 : vector<256x128xf32>
    %24 = vector.broadcast %17 : vector<1x128xf32> to vector<256x128xf32>
    %25 = arith.addf %23, %24 : vector<256x128xf32>
    %cst_21 = arith.constant 0.000000e+00 : f32
    %26 = vector.broadcast %cst_21 : f32 to vector<256x128xf32>
    %27 = arith.maximumf %25, %26 : vector<256x128xf32>
    %28 = arith.truncf %27 : vector<256x128xf32> to vector<256x128xbf16>
    %c0_22 = arith.constant 0 : index
    %c0_23 = arith.constant 0 : index
    %29 = vector.load %arg9[%c0_22, %c0_23] : memref<128x128xbf16, #tpu.memory_space<vmem>>, vector<128x128xbf16>
    %c0_24 = arith.constant 0 : index
    %c0_25 = arith.constant 0 : index
    %30 = vector.load %arg10[%c0_24, %c0_25] : memref<1x128xf32, #tpu.memory_space<vmem>>, vector<1x128xf32>
    %c0_26 = arith.constant 0 : index
    %c0_27 = arith.constant 0 : index
    %31 = vector.load %arg11[%c0_26, %c0_27] : memref<1x128xf32, #tpu.memory_space<vmem>>, vector<1x128xf32>
    %c0_28 = arith.constant 0 : index
    %c0_29 = arith.constant 0 : index
    %32 = vector.load %arg2[%c0_28, %c0_29] : memref<256x256xbf16, #tpu.memory_space<vmem>>, vector<256x256xbf16>
    %cst_30 = arith.constant dense<0.000000e+00> : vector<256x128xf32>
    %33 = tpu.matmul %32, %28, %cst_30 {dimension_numbers = #tpu.dot_dimension_numbers<[1], [0], [0], [1], [0, 0, 1, 1], [], []>} : vector<256x256xbf16>, vector<256x128xbf16>, vector<256x128xf32> -> vector<256x128xf32>
    %34 = arith.truncf %33 : vector<256x128xf32> to vector<256x128xbf16>
    %cst_31 = arith.constant dense<0.000000e+00> : vector<256x128xf32>
    %35 = tpu.matmul %34, %29, %cst_31 {dimension_numbers = #tpu.dot_dimension_numbers<[1], [0], [0], [1], [0, 0, 1, 1], [], []>} : vector<256x128xbf16>, vector<128x128xbf16>, vector<256x128xf32> -> vector<256x128xf32>
    %36 = vector.broadcast %30 : vector<1x128xf32> to vector<256x128xf32>
    %37 = arith.mulf %35, %36 : vector<256x128xf32>
    %38 = vector.broadcast %31 : vector<1x128xf32> to vector<256x128xf32>
    %39 = arith.addf %37, %38 : vector<256x128xf32>
    %cst_32 = arith.constant 0.000000e+00 : f32
    %40 = vector.broadcast %cst_32 : f32 to vector<256x128xf32>
    %41 = arith.maximumf %39, %40 : vector<256x128xf32>
    %42 = arith.truncf %41 : vector<256x128xf32> to vector<256x128xbf16>
    %c0_33 = arith.constant 0 : index
    %c0_34 = arith.constant 0 : index
    %43 = vector.load %arg12[%c0_33, %c0_34] : memref<128x128xbf16, #tpu.memory_space<vmem>>, vector<128x128xbf16>
    %cst_35 = arith.constant dense<0.000000e+00> : vector<256x128xf32>
    %44 = tpu.matmul %42, %43, %cst_35 {dimension_numbers = #tpu.dot_dimension_numbers<[1], [0], [0], [1], [0, 0, 1, 1], [], []>} : vector<256x128xbf16>, vector<128x128xbf16>, vector<256x128xf32> -> vector<256x128xf32>
    %c0_36 = arith.constant 0 : index
    %c0_37 = arith.constant 0 : index
    %45 = vector.load %arg13[%c0_36, %c0_37] : memref<1x128xf32, #tpu.memory_space<vmem>>, vector<1x128xf32>
    %46 = vector.broadcast %45 : vector<1x128xf32> to vector<256x128xf32>
    %47 = arith.addf %44, %46 : vector<256x128xf32>
    %48 = tpu.iota {dimensions = array<i32: 1>} : vector<256x128xi32>
    %c8_i32 = arith.constant 8 : i32
    %49 = vector.broadcast %c8_i32 : i32 to vector<256x128xi32>
    %50 = arith.cmpi slt, %48, %49 : vector<256x128xi32>
    %cst_38 = arith.constant -1.000000e+30 : f32
    %51 = vector.broadcast %cst_38 : f32 to vector<256x128xf32>
    %52 = arith.select %50, %47, %51 : vector<256x128xi1>, vector<256x128xf32>
    %cst_39 = arith.constant dense<0xFF800000> : vector<256xf32>
    %53 = vector.multi_reduction <maximumf>, %52, %cst_39 [1] : vector<256x128xf32> to vector<256xf32>
    %54 = vector.shape_cast %53 : vector<256xf32> to vector<256x1xf32>
    %55 = vector.broadcast %54 : vector<256x1xf32> to vector<256x128xf32>
    %56 = arith.subf %47, %55 : vector<256x128xf32>
    %57 = math.exp %56 : vector<256x128xf32>
    %cst_40 = arith.constant 0.000000e+00 : f32
    %58 = vector.broadcast %cst_40 : f32 to vector<256x128xf32>
    %59 = arith.select %50, %57, %58 : vector<256x128xi1>, vector<256x128xf32>
    %cst_41 = arith.constant dense<0.000000e+00> : vector<256xf32>
    %60 = vector.multi_reduction <add>, %59, %cst_41 [1] : vector<256x128xf32> to vector<256xf32>
    %61 = vector.shape_cast %60 : vector<256xf32> to vector<256x1xf32>
    %62 = math.log %61 : vector<256x1xf32>
    %63 = vector.broadcast %62 : vector<256x1xf32> to vector<256x128xf32>
    %64 = arith.subf %56, %63 : vector<256x128xf32>
    %c0_42 = arith.constant 0 : index
    %c0_43 = arith.constant 0 : index
    %65 = vector.load %arg14[%c0_42, %c0_43] : memref<256x128xf32, #tpu.memory_space<vmem>>, vector<256x128xf32>
    tpu.vector_store %arg14[%c0_42, %c0_43], %64 {strides = array<i32>} : memref<256x128xf32, #tpu.memory_space<vmem>>, vector<256x128xf32>,
    return
  }
  func.func @transform_0(%arg0: i32) -> (i32, i32) {
    %c0_i32 = arith.constant 0 : i32
    %c0_i32_0 = arith.constant 0 : i32
    %c0_i32_1 = arith.constant 0 : i32
    return %c0_i32, %c0_i32_0 : i32, i32
  }
  func.func @transform_1(%arg0: i32) -> (i32, i32) {
    %c0_i32 = arith.constant 0 : i32
    %c0_i32_0 = arith.constant 0 : i32
    %c0_i32_1 = arith.constant 0 : i32
    return %c0_i32, %c0_i32_0 : i32, i32
  }
  func.func @transform_2(%arg0: i32) -> (i32, i32) {
    %c0_i32 = arith.constant 0 : i32
    %c0_i32_0 = arith.constant 0 : i32
    %c0_i32_1 = arith.constant 0 : i32
    return %c0_i32, %c0_i32_0 : i32, i32
  }
  func.func @transform_3(%arg0: i32) -> (i32, i32) {
    %c0_i32 = arith.constant 0 : i32
    %c0_i32_0 = arith.constant 0 : i32
    %c0_i32_1 = arith.constant 0 : i32
    return %c0_i32, %c0_i32_0 : i32, i32
  }
  func.func @transform_4(%arg0: i32) -> (i32, i32) {
    %c0_i32 = arith.constant 0 : i32
    %c0_i32_0 = arith.constant 0 : i32
    %c0_i32_1 = arith.constant 0 : i32
    return %c0_i32, %c0_i32_0 : i32, i32
  }
  func.func @transform_5(%arg0: i32) -> (i32, i32) {
    %c0_i32 = arith.constant 0 : i32
    %c0_i32_0 = arith.constant 0 : i32
    %c0_i32_1 = arith.constant 0 : i32
    return %c0_i32, %c0_i32_0 : i32, i32
  }
  func.func @transform_6(%arg0: i32) -> (i32, i32) {
    %c0_i32 = arith.constant 0 : i32
    %c0_i32_0 = arith.constant 0 : i32
    %c0_i32_1 = arith.constant 0 : i32
    return %c0_i32, %c0_i32_0 : i32, i32
  }
  func.func @transform_7(%arg0: i32) -> (i32, i32) {
    %c0_i32 = arith.constant 0 : i32
    %c0_i32_0 = arith.constant 0 : i32
    %c0_i32_1 = arith.constant 0 : i32
    return %c0_i32, %c0_i32_0 : i32, i32
  }
  func.func @transform_8(%arg0: i32) -> (i32, i32) {
    %c0_i32 = arith.constant 0 : i32
    %c0_i32_0 = arith.constant 0 : i32
    %c0_i32_1 = arith.constant 0 : i32
    return %c0_i32, %c0_i32_0 : i32, i32
  }
  func.func @transform_9(%arg0: i32) -> (i32, i32) {
    %c0_i32 = arith.constant 0 : i32
    %c0_i32_0 = arith.constant 0 : i32
    %c0_i32_1 = arith.constant 0 : i32
    return %c0_i32, %c0_i32_0 : i32, i32
  }
  func.func @transform_10(%arg0: i32) -> (i32, i32) {
    %c0_i32 = arith.constant 0 : i32
    %c0_i32_0 = arith.constant 0 : i32
    %c0_i32_1 = arith.constant 0 : i32
    return %c0_i32, %c0_i32_0 : i32, i32
  }
  func.func @transform_11(%arg0: i32) -> (i32, i32) {
    %c0_i32 = arith.constant 0 : i32
    %c0_i32_0 = arith.constant 0 : i32
    %c0_i32_1 = arith.constant 0 : i32
    return %c0_i32, %c0_i32_0 : i32, i32
  }
  func.func @transform_12(%arg0: i32) -> (i32, i32) {
    %c0_i32 = arith.constant 0 : i32
    %c0_i32_0 = arith.constant 0 : i32
    %c0_i32_1 = arith.constant 0 : i32
    return %c0_i32, %c0_i32_0 : i32, i32
  }
  func.func @transform_13(%arg0: i32) -> (i32, i32) {
    %c0_i32 = arith.constant 0 : i32
    %c0_i32_0 = arith.constant 0 : i32
    %c0_i32_1 = arith.constant 0 : i32
    return %c0_i32, %c0_i32_0 : i32, i32
  }
}

</mosaic_0001>

<llo_original>
// kernel: tpu_custom_call.1
$region0: #{tpu_custom_call.1}
  #allocation0 [shape = 'u32[]', space=smem, size = 0x4, offset = 0x4, fixed_abs, tag = 'smem constant byte address 0x4 - core index']
  #allocation1 [shape = 'u32[144,128]{1,0:T(1,128)}', space=vmem, size = 0x12000, scoped, tag = 'internal scratch']
  %s0 = inlined_call_operand.hbm [shape: f32[8,128], index: 0, kind: input, shape index: {}]
  %s1 = inlined_call_operand.hbm [shape: f32[8,128], index: 1, kind: output, shape index: {}]
  %s2 = sld [smem:[#allocation0]]
  $region18: #{tpu_custom_call.1} parent=0
    _
  %s4 = ssub.s32 1, %s2
  %s5 = scalar_select 0, %s4, %s2
  $region1: #{tpu_custom_call.1} parent=0
    #allocation2 [shape = 'u8[4096]{0}', space=vmem, size = 0x1000, scoped, tag = 'input window, operand 0, single buffered']
    #allocation3 [shape = 's32[1]{0}', space=sflag, size = 0x4, scoped, tag = 'scoped memory for tpu_custom_call.1']
    #allocation4 [shape = 's32[1]{0}', space=sflag, size = 0x4, scoped, tag = 'scoped memory for tpu_custom_call.1']
    #allocation5 [shape = 'u8[4096]{0}', space=vmem, size = 0x1000, scoped, tag = 'output window, operand 0, single buffered']
    %6 = vsyncpa [#allocation3], 0
    %7 = vsyncpa [#allocation4], 0
    // Predicated region
    $region2: #{tpu_custom_call.1} parent=1 // pred_check
      _
    $region3: #{tpu_custom_call.1} parent=1 // pred_check_branch
      %9 = sbr.rel (0) target = $region5
    $region4: #{tpu_custom_call.1} parent=1 // pred_region
      %s11 = ssub.s32 128, 128
      %12 = vsyncadd [#allocation3], %s11
      %s14 = sshll.u32 [#allocation2], 4
      %s15 = int_to_ptr.vmem [resolvable:$true] %s14
      %17 = dma.hbm_to_vmem [thread:$0]  %s0, 128, %s15, [#allocation3]
    $region5: #{tpu_custom_call.1} parent=1 // pred_fallthru
      _
    // Predicated region
    $region6: #{tpu_custom_call.1} parent=1 // pred_check
      _
    $region7: #{tpu_custom_call.1} parent=1 // pred_check_branch
      %19 = sbr.rel (0) target = $region9
    $region8: #{tpu_custom_call.1} parent=1 // pred_region
      %20 = dma.done [#allocation3], 128
    $region9: #{tpu_custom_call.1} parent=1 // pred_fallthru
      _
    %v21 = vld [vmem:[#allocation2] sm:$0xff]
    %v22 = vadd.f32 %v21, 1.0
    %23 = vst [vmem:[#allocation5] sm:$0xff] %v22
    // Predicated region
    $region10: #{tpu_custom_call.1} parent=1 // pred_check
      _
    $region11: #{tpu_custom_call.1} parent=1 // pred_check_branch
      %25 = sbr.rel (0) target = $region13
    $region12: #{tpu_custom_call.1} parent=1 // pred_region
      %s27 = ssub.s32 128, 128
      %28 = vsyncadd [#allocation4], %s27
      %s30 = sshll.u32 [#allocation5], 4
      %s31 = int_to_ptr.vmem [resolvable:$true] %s30
      %33 = dma.vmem_to_hbm [thread:$0]  %s31, 128, %s1, [#allocation4]
    $region13: #{tpu_custom_call.1} parent=1 // pred_fallthru
      _
    // Predicated region
    $region14: #{tpu_custom_call.1} parent=1 // pred_check
      _
    $region15: #{tpu_custom_call.1} parent=1 // pred_check_branch
      %35 = sbr.rel (0) target = $region17
    $region16: #{tpu_custom_call.1} parent=1 // pred_region
      %36 = dma.done [#allocation4], 128
    $region17: #{tpu_custom_call.1} parent=1 // pred_fallthru
      _
    %37 = vsyncpa [#allocation3], 1
    %38 = vsyncpa [#allocation4], 1

// kernel: _gin_forward_impl.1
$region0: #{_gin_forward_impl.1}
  #allocation0 [shape = 'u32[]', space=smem, size = 0x4, offset = 0x4, fixed_abs, tag = 'smem constant byte address 0x4 - core index']
  #allocation1 [shape = 'u32[144,128]{1,0:T(1,128)}', space=vmem, size = 0x12000, scoped, tag = 'internal scratch']
  %s0 = inlined_call_operand.vmem [shape: bf16[256,128], index: 0, kind: input, shape index: {}]
  %s1 = inlined_call_operand.vmem [shape: bf16[256,256], index: 1, kind: input, shape index: {}]
  %s2 = inlined_call_operand.vmem [shape: bf16[128,128], index: 2, kind: input, shape index: {}]
  %s3 = inlined_call_operand.vmem [shape: f32[1,128], index: 3, kind: input, shape index: {}]
  %s4 = inlined_call_operand.vmem [shape: f32[1,128], index: 4, kind: input, shape index: {}]
  %s5 = inlined_call_operand.vmem [shape: bf16[128,128], index: 5, kind: input, shape index: {}]
  %s6 = inlined_call_operand.vmem [shape: f32[1,128], index: 6, kind: input, shape index: {}]
  %s7 = inlined_call_operand.vmem [shape: f32[1,128], index: 7, kind: input, shape index: {}]
  %s8 = inlined_call_operand.hbm [shape: bf16[128,128], index: 8, kind: input, shape index: {}]
  %s9 = inlined_call_operand.vmem [shape: f32[1,128], index: 9, kind: input, shape index: {}]
  %s10 = inlined_call_operand.vmem [shape: f32[1,128], index: 10, kind: input, shape index: {}]
  %s11 = inlined_call_operand.hbm [shape: bf16[128,128], index: 11, kind: input, shape index: {}]
  %s12 = inlined_call_operand.vmem [shape: f32[1,128], index: 12, kind: input, shape index: {}]
  %s13 = inlined_call_operand.vmem [shape: f32[256,128], index: 13, kind: output, shape index: {}]
  %s14 = sld [smem:[#allocation0]]
  $region70: #{_gin_forward_impl.1} parent=0
    _
  %s16 = ssub.s32 1, %s14
  %s17 = scalar_select 0, %s16, %s14
  $region1: #{_gin_forward_impl.1} parent=0
    #allocation2 [shape = 'u8[32768]{0}', space=vmem, size = 0x8000, scoped, tag = 'input window, operand 8, single buffered']
    #allocation3 [shape = 's32[1]{0}', space=sflag, size = 0x4, scoped, tag = 'scoped memory for _gin_forward_impl.1']
    #allocation4 [shape = 'u8[32768]{0}', space=vmem, size = 0x8000, scoped, tag = 'input window, operand 11, single buffered']
    #allocation5 [shape = 's32[1]{0}', space=sflag, size = 0x4, scoped, tag = 'scoped memory for _gin_forward_impl.1']
    %18 = vsyncpa [#allocation3], 0
    %19 = vsyncpa [#allocation5], 0
    // Predicated region
    $region2: #{_gin_forward_impl.1} parent=1 // pred_check
      _
    $region3: #{_gin_forward_impl.1} parent=1 // pred_check_branch
      %21 = sbr.rel (0) target = $region5
    $region4: #{_gin_forward_impl.1} parent=1 // pred_region
      _
    $region5: #{_gin_forward_impl.1} parent=1 // pred_fallthru
      _
    // Predicated region
    $region6: #{_gin_forward_impl.1} parent=1 // pred_check
      _
    $region7: #{_gin_forward_impl.1} parent=1 // pred_check_branch
      %23 = sbr.rel (0) target = $region9
    $region8: #{_gin_forward_impl.1} parent=1 // pred_region
      _
    $region9: #{_gin_forward_impl.1} parent=1 // pred_fallthru
      _
    // Predicated region
    $region10: #{_gin_forward_impl.1} parent=1 // pred_check
      _
    $region11: #{_gin_forward_impl.1} parent=1 // pred_check_branch
      %25 = sbr.rel (0) target = $region13
    $region12: #{_gin_forward_impl.1} parent=1 // pred_region
      _
    $region13: #{_gin_forward_impl.1} parent=1 // pred_fallthru
      _
    // Predicated region
    $region14: #{_gin_forward_impl.1} parent=1 // pred_check
      _
    $region15: #{_gin_forward_impl.1} parent=1 // pred_check_branch
      %27 = sbr.rel (0) target = $region17
    $region16: #{_gin_forward_impl.1} parent=1 // pred_region
      _
    $region17: #{_gin_forward_impl.1} parent=1 // pred_fallthru
      _
    // Predicated region
    $region18: #{_gin_forward_impl.1} parent=1 // pred_check
      _
    $region19: #{_gin_forward_impl.1} parent=1 // pred_check_branch
      %29 = sbr.rel (0) target = $region21
    $region20: #{_gin_forward_impl.1} parent=1 // pred_region
      _
    $region21: #{_gin_forward_impl.1} parent=1 // pred_fallthru
      _
    // Predicated region
    $region22: #{_gin_forward_impl.1} parent=1 // pred_check
      _
    $region23: #{_gin_forward_impl.1} parent=1 // pred_check_branch
      %31 = sbr.rel (0) target = $region25
    $region24: #{_gin_forward_impl.1} parent=1 // pred_region
      _
    $region25: #{_gin_forward_impl.1} parent=1 // pred_fallthru
      _
    // Predicated region
    $region26: #{_gin_forward_impl.1} parent=1 // pred_check
      _
    $region27: #{_gin_forward_impl.1} parent=1 // pred_check_branch
      %33 = sbr.rel (0) target = $region29
    $region28: #{_gin_forward_impl.1} parent=1 // pred_region
      _
    $region29: #{_gin_forward_impl.1} parent=1 // pred_fallthru
      _
    // Predicated region
    $region30: #{_gin_forward_impl.1} parent=1 // pred_check
      _
    $region31: #{_gin_forward_impl.1} parent=1 // pred_check_branch
      %35 = sbr.rel (0) target = $region33
    $region32: #{_gin_forward_impl.1} parent=1 // pred_region
      _
    $region33: #{_gin_forward_impl.1} parent=1 // pred_fallthru
      _
    // Predicated region
    $region34: #{_gin_forward_impl.1} parent=1 // pred_check
      _
    $region35: #{_gin_forward_impl.1} parent=1 // pred_check_branch
      %37 = sbr.rel (0) target = $region37
    $region36: #{_gin_forward_impl.1} parent=1 // pred_region
      %s39 = ssub.s32 1024, 1024
      %40 = vsyncadd [#allocation3], %s39
      %s41 = sshll.u32 [#allocation2], 4
      %s42 = int_to_ptr.vmem [resolvable:$true] %s41
      %47 = dma.hbm_to_vmem [thread:$0]  %s8, 1024, %s42, [#allocation3], 64, 64, 4
    $region37: #{_gin_forward_impl.1} parent=1 // pred_fallthru
      _
    // Predicated region
    $region38: #{_gin_forward_impl.1} parent=1 // pred_check
      _
    $region39: #{_gin_forward_impl.1} parent=1 // pred_check_branch
      %49 = sbr.rel (0) target = $region41
    $region40: #{_gin_forward_impl.1} parent=1 // pred_region
      _
    $region41: #{_gin_forward_impl.1} parent=1 // pred_fallthru
      _
    // Predicated region
    $region42: #{_gin_forward_impl.1} parent=1 // pred_check
      _
    $region43: #{_gin_forward_impl.1} parent=1 // pred_check_branch
      %51 = sbr.rel (0) target = $region45
    $region44: #{_gin_forward_impl.1} parent=1 // pred_region
      _
    $region45: #{_gin_forward_impl.1} parent=1 // pred_fallthru
      _
    // Predicated region
    $region46: #{_gin_forward_impl.1} parent=1 // pred_check
      _
    $region47: #{_gin_forward_impl.1} parent=1 // pred_check_branch
      %53 = sbr.rel (0) target = $region49
    $region48: #{_gin_forward_impl.1} parent=1 // pred_region
      %s55 = ssub.s32 1024, 1024
      %56 = vsyncadd [#allocation5], %s55
      %s57 = sshll.u32 [#allocation4], 4
      %s58 = int_to_ptr.vmem [resolvable:$true] %s57
      %63 = dma.hbm_to_vmem [thread:$0]  %s11, 1024, %s58, [#allocation5], 64, 64, 4
    $region49: #{_gin_forward_impl.1} parent=1 // pred_fallthru
      _
    // Predicated region
    $region50: #{_gin_forward_impl.1} parent=1 // pred_check
      _
    $region51: #{_gin_forward_impl.1} parent=1 // pred_check_branch
      %65 = sbr.rel (0) target = $region53
    $region52: #{_gin_forward_impl.1} parent=1 // pred_region
      _
    $region53: #{_gin_forward_impl.1} parent=1 // pred_fallthru
      _
    // Predicated region
    $region54: #{_gin_forward_impl.1} parent=1 // pred_check
      _
    $region55: #{_gin_forward_impl.1} parent=1 // pred_check_branch
      %67 = sbr.rel (0) target = $region57
    $region56: #{_gin_forward_impl.1} parent=1 // pred_region
      %68 = dma.done [#allocation3], 1024
    $region57: #{_gin_forward_impl.1} parent=1 // pred_fallthru
      _
    // Predicated region
    $region58: #{_gin_forward_impl.1} parent=1 // pred_check
      _
    $region59: #{_gin_forward_impl.1} parent=1 // pred_check_branch
      %70 = sbr.rel (0) target = $region61
    $region60: #{_gin_forward_impl.1} parent=1 // pred_region
      %71 = dma.done [#allocation5], 1024
    $region61: #{_gin_forward_impl.1} parent=1 // pred_fallthru
      _
    %v73 = vld [vmem:[%s0] sm:$0xf]
    %v74 = vld [vmem:[%s0 + $0x4] sm:$0xf]
    %v75 = vld [vmem:[%s0 + $0x8] sm:$0xf]
    %v76 = vld [vmem:[%s0 + $0xc] sm:$0xf]
    %v77 = vld [vmem:[%s0 + $0x10] sm:$0xf]
    %v78 = vld [vmem:[%s0 + $0x14] sm:$0xf]
    %v79 = vld [vmem:[%s0 + $0x18] sm:$0xf]
    %v80 = vld [vmem:[%s0 + $0x1c] sm:$0xf]
    %v81 = vld [vmem:[%s0 + $0x20] sm:$0xf]
    %v82 = vld [vmem:[%s0 + $0x24] sm:$0xf]
    %v83 = vld [vmem:[%s0 + $0x28] sm:$0xf]
    %v84 = vld [vmem:[%s0 + $0x2c] sm:$0xf]
    %v85 = vld [vmem:[%s0 + $0x30] sm:$0xf]
    %v86 = vld [vmem:[%s0 + $0x34] sm:$0xf]
    %v87 = vld [vmem:[%s0 + $0x38] sm:$0xf]
    %v88 = vld [vmem:[%s0 + $0x3c] sm:$0xf]
    %v89 = vld [vmem:[%s0 + $0x40] sm:$0xf]
    %v90 = vld [vmem:[%s0 + $0x44] sm:$0xf]
    %v91 = vld [vmem:[%s0 + $0x48] sm:$0xf]
    %v92 = vld [vmem:[%s0 + $0x4c] sm:$0xf]
    %v93 = vld [vmem:[%s0 + $0x50] sm:$0xf]
    %v94 = vld [vmem:[%s0 + $0x54] sm:$0xf]
    %v95 = vld [vmem:[%s0 + $0x58] sm:$0xf]
    %v96 = vld [vmem:[%s0 + $0x5c] sm:$0xf]
    %v97 = vld [vmem:[%s0 + $0x60] sm:$0xf]
    %v98 = vld [vmem:[%s0 + $0x64] sm:$0xf]
    %v99 = vld [vmem:[%s0 + $0x68] sm:$0xf]
    %v100 = vld [vmem:[%s0 + $0x6c] sm:$0xf]
    %v101 = vld [vmem:[%s0 + $0x70] sm:$0xf]
    %v102 = vld [vmem:[%s0 + $0x74] sm:$0xf]
    %v103 = vld [vmem:[%s0 + $0x78] sm:$0xf]
    %v104 = vld [vmem:[%s0 + $0x7c] sm:$0xf]
    %v105 = vld [vmem:[%s2] sm:$0xf]
    %v106 = vld [vmem:[%s2 + $0x4] sm:$0xf]
    %v107 = vld [vmem:[%s2 + $0x8] sm:$0xf]
    %v108 = vld [vmem:[%s2 + $0xc] sm:$0xf]
    %v109 = vld [vmem:[%s2 + $0x10] sm:$0xf]
    %v110 = vld [vmem:[%s2 + $0x14] sm:$0xf]
    %v111 = vld [vmem:[%s2 + $0x18] sm:$0xf]
    %v112 = vld [vmem:[%s2 + $0x1c] sm:$0xf]
    %v113 = vld [vmem:[%s2 + $0x20] sm:$0xf]
    %v114 = vld [vmem:[%s2 + $0x24] sm:$0xf]
    %v115 = vld [vmem:[%s2 + $0x28] sm:$0xf]
    %v116 = vld [vmem:[%s2 + $0x2c] sm:$0xf]
    %v117 = vld [vmem:[%s2 + $0x30] sm:$0xf]
    %v118 = vld [vmem:[%s2 + $0x34] sm:$0xf]
    %v119 = vld [vmem:[%s2 + $0x38] sm:$0xf]
    %v120 = vld [vmem:[%s2 + $0x3c] sm:$0xf]
    %v121 = vld [vmem:[%s3] sm:$0x1]
    %v122 = vld [vmem:[%s4] sm:$0x1]
    %v123 = vld [vmem:[%s1] sm:$0xff]
    %v124 = vld [vmem:[%s1 + $0x8] sm:$0xff]
    %v125 = vld [vmem:[%s1 + $0x10] sm:$0xff]
    %v126 = vld [vmem:[%s1 + $0x18] sm:$0xff]
    %v127 = vld [vmem:[%s1 + $0x20] sm:$0xff]
    %v128 = vld [vmem:[%s1 + $0x28] sm:$0xff]
    %v129 = vld [vmem:[%s1 + $0x30] sm:$0xff]
    %v130 = vld [vmem:[%s1 + $0x38] sm:$0xff]
    %v131 = vld [vmem:[%s1 + $0x40] sm:$0xff]
    %v132 = vld [vmem:[%s1 + $0x48] sm:$0xff]
    %v133 = vld [vmem:[%s1 + $0x50] sm:$0xff]
    %v134 = vld [vmem:[%s1 + $0x58] sm:$0xff]
    %v135 = vld [vmem:[%s1 + $0x60] sm:$0xff]
    %v136 = vld [vmem:[%s1 + $0x68] sm:$0xff]
    %v137 = vld [vmem:[%s1 + $0x70] sm:$0xff]
    %v138 = vld [vmem:[%s1 + $0x78] sm:$0xff]
    %v139 = vld [vmem:[%s1 + $0x80] sm:$0xff]
    %v140 = vld [vmem:[%s1 + $0x88] sm:$0xff]
    %v141 = vld [vmem:[%s1 + $0x90] sm:$0xff]
    %v142 = vld [vmem:[%s1 + $0x98] sm:$0xff]
    %v143 = vld [vmem:[%s1 + $0xa0] sm:$0xff]
    %v144 = vld [vmem:[%s1 + $0xa8] sm:$0xff]
    %v145 = vld [vmem:[%s1 + $0xb0] sm:$0xff]
    %v146 = vld [vmem:[%s1 + $0xb8] sm:$0xff]
    %v147 = vld [vmem:[%s1 + $0xc0] sm:$0xff]
    %v148 = vld [vmem:[%s1 + $0xc8] sm:$0xff]
    %v149 = vld [vmem:[%s1 + $0xd0] sm:$0xff]
    %v150 = vld [vmem:[%s1 + $0xd8] sm:$0xff]
    %v151 = vld [vmem:[%s1 + $0xe0] sm:$0xff]
    %v152 = vld [vmem:[%s1 + $0xe8] sm:$0xff]
    %v153 = vld [vmem:[%s1 + $0xf0] sm:$0xff]
    %v154 = vld [vmem:[%s1 + $0xf8] sm:$0xff]
    %v187 = vunpack.c.l.b16 %v123
    %v188 = vunpack.c.h.b16 %v123
    %v189 = vunpack.c.l.b16 %v124
    %v190 = vunpack.c.h.b16 %v124
    %v191 = vunpack.c.l.b16 %v125
    %v192 = vunpack.c.h.b16 %v125
    %v193 = vunpack.c.l.b16 %v126
    %v194 = vunpack.c.h.b16 %v126
    %v195 = vunpack.c.l.b16 %v127
    %v196 = vunpack.c.h.b16 %v127
    %v197 = vunpack.c.l.b16 %v128
    %v198 = vunpack.c.h.b16 %v128
    %v199 = vunpack.c.l.b16 %v129
    %v200 = vunpack.c.h.b16 %v129
    %v201 = vunpack.c.l.b16 %v130
    %v202 = vunpack.c.h.b16 %v130
    %v203 = vunpack.c.l.b16 %v131
    %v204 = vunpack.c.h.b16 %v131
    %v205 = vunpack.c.l.b16 %v132
    %v206 = vunpack.c.h.b16 %v132
    %v207 = vunpack.c.l.b16 %v133
    %v208 = vunpack.c.h.b16 %v133
    %v209 = vunpack.c.l.b16 %v134
    %v210 = vunpack.c.h.b16 %v134
    %v211 = vunpack.c.l.b16 %v135
    %v212 = vunpack.c.h.b16 %v135
    %v213 = vunpack.c.l.b16 %v136
    %v214 = vunpack.c.h.b16 %v136
    %v215 = vunpack.c.l.b16 %v137
    %v216 = vunpack.c.h.b16 %v137
    %v217 = vunpack.c.l.b16 %v138
    %v218 = vunpack.c.h.b16 %v138
    %v219 = vunpack.c.l.b16 %v139
    %v220 = vunpack.c.h.b16 %v139
    %v221 = vunpack.c.l.b16 %v140
    %v222 = vunpack.c.h.b16 %v140
    %v223 = vunpack.c.l.b16 %v141
    %v224 = vunpack.c.h.b16 %v141
    %v225 = vunpack.c.l.b16 %v142
    %v226 = vunpack.c.h.b16 %v142
    %v227 = vunpack.c.l.b16 %v143
    %v228 = vunpack.c.h.b16 %v143
    %v229 = vunpack.c.l.b16 %v144
    %v230 = vunpack.c.h.b16 %v144
    %v231 = vunpack.c.l.b16 %v145
    %v232 = vunpack.c.h.b16 %v145
    %v233 = vunpack.c.l.b16 %v146
    %v234 = vunpack.c.h.b16 %v146
    %v235 = vunpack.c.l.b16 %v147
    %v236 = vunpack.c.h.b16 %v147
    %v237 = vunpack.c.l.b16 %v148
    %v238 = vunpack.c.h.b16 %v148
    %v239 = vunpack.c.l.b16 %v149
    %v240 = vunpack.c.h.b16 %v149
    %v241 = vunpack.c.l.b16 %v150
    %v242 = vunpack.c.h.b16 %v150
    %v243 = vunpack.c.l.b16 %v151
    %v244 = vunpack.c.h.b16 %v151
    %v245 = vunpack.c.l.b16 %v152
    %v246 = vunpack.c.h.b16 %v152
    %v247 = vunpack.c.l.b16 %v153
    %v248 = vunpack.c.h.b16 %v153
    %v249 = vunpack.c.l.b16 %v154
    %v250 = vunpack.c.h.b16 %v154
    %v251 = vpack.c.b16 %v189, %v187
    %v252 = vpack.c.b16 %v190, %v188
    %v253 = vpack.c.b16 %v193, %v191
    %v254 = vpack.c.b16 %v194, %v192
    %v255 = vpack.c.b16 %v197, %v195
    %v256 = vpack.c.b16 %v198, %v196
    %v257 = vpack.c.b16 %v201, %v199
    %v258 = vpack.c.b16 %v202, %v200
    %v259 = vpack.c.b16 %v205, %v203
    %v260 = vpack.c.b16 %v206, %v204
    %v261 = vpack.c.b16 %v209, %v207
    %v262 = vpack.c.b16 %v210, %v208
    %v263 = vpack.c.b16 %v213, %v211
    %v264 = vpack.c.b16 %v214, %v212
    %v265 = vpack.c.b16 %v217, %v215
    %v266 = vpack.c.b16 %v218, %v216
    %v267 = vpack.c.b16 %v221, %v219
    %v268 = vpack.c.b16 %v222, %v220
    %v269 = vpack.c.b16 %v225, %v223
    %v270 = vpack.c.b16 %v226, %v224
    %v271 = vpack.c.b16 %v229, %v227
    %v272 = vpack.c.b16 %v230, %v228
    %v273 = vpack.c.b16 %v233, %v231
    %v274 = vpack.c.b16 %v234, %v232
    %v275 = vpack.c.b16 %v237, %v235
    %v276 = vpack.c.b16 %v238, %v236
    %v277 = vpack.c.b16 %v241, %v239
    %v278 = vpack.c.b16 %v242, %v240
    %v279 = vpack.c.b16 %v245, %v243
    %v280 = vpack.c.b16 %v246, %v244
    %v281 = vpack.c.b16 %v249, %v247
    %v282 = vpack.c.b16 %v250, %v248
    %v347 = vunpack.c.l.b16 %v73
    %v348 = vunpack.c.l.b16 %v74
    %v349 = vunpack.c.l.b16 %v75
    %v350 = vunpack.c.l.b16 %v76
    %v351 = vunpack.c.l.b16 %v77
    %v352 = vunpack.c.l.b16 %v78
    %v353 = vunpack.c.l.b16 %v79
    %v354 = vunpack.c.l.b16 %v80
    %v355 = vunpack.c.l.b16 %v81
    %v356 = vunpack.c.l.b16 %v82
    %v357 = vunpack.c.l.b16 %v83
    %v358 = vunpack.c.l.b16 %v84
    %v359 = vunpack.c.l.b16 %v85
    %v360 = vunpack.c.l.b16 %v86
    %v361 = vunpack.c.l.b16 %v87
    %v362 = vunpack.c.l.b16 %v88
    %v363 = vunpack.c.l.b16 %v89
    %v364 = vunpack.c.l.b16 %v90
    %v365 = vunpack.c.l.b16 %v91
    %v366 = vunpack.c.l.b16 %v92
    %v367 = vunpack.c.l.b16 %v93
    %v368 = vunpack.c.l.b16 %v94
    %v369 = vunpack.c.l.b16 %v95
    %v370 = vunpack.c.l.b16 %v96
    %v371 = vunpack.c.l.b16 %v97
    %v372 = vunpack.c.l.b16 %v98
    %v373 = vunpack.c.l.b16 %v99
    %v374 = vunpack.c.l.b16 %v100
    %v375 = vunpack.c.l.b16 %v101
    %v376 = vunpack.c.l.b16 %v102
    %v377 = vunpack.c.l.b16 %v103
    %v378 = vunpack.c.l.b16 %v104
    %v379 = vpack.c.b16 %v348, %v347
    %v380 = vpack.c.b16 %v350, %v349
    %v381 = vpack.c.b16 %v352, %v351
    %v382 = vpack.c.b16 %v354, %v353
    %v383 = vpack.c.b16 %v356, %v355
    %v384 = vpack.c.b16 %v358, %v357
    %v385 = vpack.c.b16 %v360, %v359
    %v386 = vpack.c.b16 %v362, %v361
    %v387 = vpack.c.b16 %v364, %v363
    %v388 = vpack.c.b16 %v366, %v365
    %v389 = vpack.c.b16 %v368, %v367
    %v390 = vpack.c.b16 %v370, %v369
    %v391 = vpack.c.b16 %v372, %v371
    %v392 = vpack.c.b16 %v374, %v373
    %v393 = vpack.c.b16 %v376, %v375
    %v394 = vpack.c.b16 %v378, %v377
    %411 = vmatprep.subr.bf16.mxu0 0
    %412 = vmatpush1.bf16.msra.mxu0 %v379
    %413 = vmatprep.subr.bf16.mxu0 0
    %414 = vmatpush1.bf16.msra.mxu0 %v380
    %415 = vmatprep.subr.bf16.mxu0 0
    %416 = vmatpush1.bf16.msra.mxu0 %v381
    %417 = vmatprep.subr.bf16.mxu0 0
    %418 = vmatpush1.bf16.msra.mxu0 %v382
    %419 = vmatprep.subr.bf16.mxu0 0
    %420 = vmatpush1.bf16.msra.mxu0 %v383
    %421 = vmatprep.subr.bf16.mxu0 0
    %422 = vmatpush1.bf16.msra.mxu0 %v384
    %423 = vmatprep.subr.bf16.mxu0 0
    %424 = vmatpush1.bf16.msra.mxu0 %v385
    %425 = vmatprep.subr.bf16.mxu0 0
    %426 = vmatpush1.bf16.msra.mxu0 %v386
    %427 = vmatprep.subr.bf16.mxu0 0
    %428 = vmatpush1.bf16.msra.mxu0 %v387
    %429 = vmatprep.subr.bf16.mxu0 0
    %430 = vmatpush1.bf16.msra.mxu0 %v388
    %431 = vmatprep.subr.bf16.mxu0 0
    %432 = vmatpush1.bf16.msra.mxu0 %v389
    %433 = vmatprep.subr.bf16.mxu0 0
    %434 = vmatpush1.bf16.msra.mxu0 %v390
    %435 = vmatprep.subr.bf16.mxu0 0
    %436 = vmatpush1.bf16.msra.mxu0 %v391
    %437 = vmatprep.subr.bf16.mxu0 0
    %438 = vmatpush1.bf16.msra.mxu0 %v392
    %439 = vmatprep.subr.bf16.mxu0 0
    %440 = vmatpush1.bf16.msra.mxu0 %v393
    %441 = vmatprep.subr.bf16.mxu0 0
    %442 = vmatpush1.bf16.msra.mxu0 %v394
    %443 = vmatprep.mubr.bf16.mxu0 %v252
    %444 = vmatmul.mubr.bf16.gmra.mrb[0].mxu0 %v251
    %v445 = vpop.f32.mrb[0].mxu0
    %v446 = vadd.f32 0.0, %v445
    %v447 = vpop.f32.mrb[0].mxu0
    %v448 = vpop.f32.mrb[0].mxu0
    %v449 = vadd.f32 0.0, %v448
    %v450 = vpop.f32.mrb[0].mxu0
    %451 = vmatprep.mubr.bf16.mxu0 %v254
    %452 = vmatmul.mubr.bf16.gmra.mrb[0].mxu0 %v253
    %v453 = vpop.f32.mrb[0].mxu0
    %v454 = vadd.f32 0.0, %v453
    %v455 = vpop.f32.mrb[0].mxu0
    %v456 = vpop.f32.mrb[0].mxu0
    %v457 = vadd.f32 0.0, %v456
    %v458 = vpop.f32.mrb[0].mxu0
    %459 = vmatprep.mubr.bf16.mxu0 %v256
    %460 = vmatmul.mubr.bf16.gmra.mrb[0].mxu0 %v255
    %v461 = vpop.f32.mrb[0].mxu0
    %v462 = vadd.f32 0.0, %v461
    %v463 = vpop.f32.mrb[0].mxu0
    %v464 = vpop.f32.mrb[0].mxu0
    %v465 = vadd.f32 0.0, %v464
    %v466 = vpop.f32.mrb[0].mxu0
    %467 = vmatprep.mubr.bf16.mxu0 %v258
    %468 = vmatmul.mubr.bf16.gmra.mrb[0].mxu0 %v257
    %v469 = vpop.f32.mrb[0].mxu0
    %v470 = vadd.f32 0.0, %v469
    %v471 = vpop.f32.mrb[0].mxu0
    %v472 = vpop.f32.mrb[0].mxu0
    %v473 = vadd.f32 0.0, %v472
    %v474 = vpop.f32.mrb[0].mxu0
    %475 = vmatprep.mubr.bf16.mxu0 %v260
    %476 = vmatmul.mubr.bf16.gmra.mrb[0].mxu0 %v259
    %v477 = vpop.f32.mrb[0].mxu0
    %v478 = vadd.f32 0.0, %v477
    %v479 = vpop.f32.mrb[0].mxu0
    %v480 = vpop.f32.mrb[0].mxu0
    %v481 = vadd.f32 0.0, %v480
    %v482 = vpop.f32.mrb[0].mxu0
    %483 = vmatprep.mubr.bf16.mxu0 %v262
    %484 = vmatmul.mubr.bf16.gmra.mrb[0].mxu0 %v261
    %v485 = vpop.f32.mrb[0].mxu0
    %v486 = vadd.f32 0.0, %v485
    %v487 = vpop.f32.mrb[0].mxu0
    %v488 = vpop.f32.mrb[0].mxu0
    %v489 = vadd.f32 0.0, %v488
    %v490 = vpop.f32.mrb[0].mxu0
    %491 = vmatprep.mubr.bf16.mxu0 %v264
    %492 = vmatmul.mubr.bf16.gmra.mrb[0].mxu0 %v263
    %v493 = vpop.f32.mrb[0].mxu0
    %v494 = vadd.f32 0.0, %v493
    %v495 = vpop.f32.mrb[0].mxu0
    %v496 = vpop.f32.mrb[0].mxu0
    %v497 = vadd.f32 0.0, %v496
    %v498 = vpop.f32.mrb[0].mxu0
    %499 = vmatprep.mubr.bf16.mxu0 %v266
    %500 = vmatmul.mubr.bf16.gmra.mrb[0].mxu0 %v265
    %v501 = vpop.f32.mrb[0].mxu0
    %v502 = vadd.f32 0.0, %v501
    %v503 = vpop.f32.mrb[0].mxu0
    %v504 = vpop.f32.mrb[0].mxu0
    %v505 = vadd.f32 0.0, %v504
    %v506 = vpop.f32.mrb[0].mxu0
    %507 = vmatprep.mubr.bf16.mxu0 %v268
    %508 = vmatmul.mubr.bf16.gmra.mrb[0].mxu0 %v267
    %v509 = vpop.f32.mrb[0].mxu0
    %v510 = vadd.f32 0.0, %v509
    %v511 = vpop.f32.mrb[0].mxu0
    %v512 = vpop.f32.mrb[0].mxu0
    %v513 = vadd.f32 0.0, %v512
    %v514 = vpop.f32.mrb[0].mxu0
    %515 = vmatprep.mubr.bf16.mxu0 %v270
    %516 = vmatmul.mubr.bf16.gmra.mrb[0].mxu0 %v269
    %v517 = vpop.f32.mrb[0].mxu0
    %v518 = vadd.f32 0.0, %v517
    %v519 = vpop.f32.mrb[0].mxu0
    %v520 = vpop.f32.mrb[0].mxu0
    %v521 = vadd.f32 0.0, %v520
    %v522 = vpop.f32.mrb[0].mxu0
    %523 = vmatprep.mubr.bf16.mxu0 %v272
    %524 = vmatmul.mubr.bf16.gmra.mrb[0].mxu0 %v271
    %v525 = vpop.f32.mrb[0].mxu0
    %v526 = vadd.f32 0.0, %v525
    %v527 = vpop.f32.mrb[0].mxu0
    %v528 = vpop.f32.mrb[0].mxu0
    %v529 = vadd.f32 0.0, %v528
    %v530 = vpop.f32.mrb[0].mxu0
    %531 = vmatprep.mubr.bf16.mxu0 %v274
    %532 = vmatmul.mubr.bf16.gmra.mrb[0].mxu0 %v273
    %v533 = vpop.f32.mrb[0].mxu0
    %v534 = vadd.f32 0.0, %v533
    %v535 = vpop.f32.mrb[0].mxu0
    %v536 = vpop.f32.mrb[0].mxu0
    %v537 = vadd.f32 0.0, %v536
    %v538 = vpop.f32.mrb[0].mxu0
    %539 = vmatprep.mubr.bf16.mxu0 %v276
    %540 = vmatmul.mubr.bf16.gmra.mrb[0].mxu0 %v275
    %v541 = vpop.f32.mrb[0].mxu0
    %v542 = vadd.f32 0.0, %v541
    %v543 = vpop.f32.mrb[0].mxu0
    %v544 = vpop.f32.mrb[0].mxu0
    %v545 = vadd.f32 0.0, %v544
    %v546 = vpop.f32.mrb[0].mxu0
    %547 = vmatprep.mubr.bf16.mxu0 %v278
    %548 = vmatmul.mubr.bf16.gmra.mrb[0].mxu0 %v277
    %v549 = vpop.f32.mrb[0].mxu0
    %v550 = vadd.f32 0.0, %v549
    %v551 = vpop.f32.mrb[0].mxu0
    %v552 = vpop.f32.mrb[0].mxu0
    %v553 = vadd.f32 0.0, %v552
    %v554 = vpop.f32.mrb[0].mxu0
    %555 = vmatprep.mubr.bf16.mxu0 %v280
    %556 = vmatmul.mubr.bf16.gmra.mrb[0].mxu0 %v279
    %v557 = vpop.f32.mrb[0].mxu0
    %v558 = vadd.f32 0.0, %v557
    %v559 = vpop.f32.mrb[0].mxu0
    %v560 = vpop.f32.mrb[0].mxu0
    %v561 = vadd.f32 0.0, %v560
    %v562 = vpop.f32.mrb[0].mxu0
    %563 = vmatprep.mubr.bf16.mxu0 %v282
    %564 = vmatmul.mubr.bf16.gmra.mrb[0].mxu0 %v281
    %v565 = vpop.f32.mrb[0].mxu0
    %v566 = vadd.f32 0.0, %v565
    %v567 = vpop.f32.mrb[0].mxu0
    %v568 = vpop.f32.mrb[0].mxu0
    %v569 = vadd.f32 0.0, %v568
    %v570 = vpop.f32.mrb[0].mxu0
    %571 = vdwg.mxu0
    %v572 = vpack.c.bf16 %v449, %v446
    %v573 = vpack.c.bf16 %v457, %v454
    %v574 = vpack.c.bf16 %v465, %v462
    %v575 = vpack.c.bf16 %v473, %v470
    %v576 = vpack.c.bf16 %v481, %v478
    %v577 = vpack.c.bf16 %v489, %v486
    %v578 = vpack.c.bf16 %v497, %v494
    %v579 = vpack.c.bf16 %v505, %v502
    %v580 = vpack.c.bf16 %v513, %v510
    %v581 = vpack.c.bf16 %v521, %v518
    %v582 = vpack.c.bf16 %v529, %v526
    %v583 = vpack.c.bf16 %v537, %v534
    %v584 = vpack.c.bf16 %v545, %v542
    %v585 = vpack.c.bf16 %v553, %v550
    %v586 = vpack.c.bf16 %v561, %v558
    %v587 = vpack.c.bf16 %v569, %v566
    %v604 = vunpack.c.l.b16 %v105
    %v605 = vunpack.c.l.b16 %v106
    %v606 = vunpack.c.l.b16 %v107
    %v607 = vunpack.c.l.b16 %v108
    %v608 = vunpack.c.l.b16 %v109
    %v609 = vunpack.c.l.b16 %v110
    %v610 = vunpack.c.l.b16 %v111
    %v611 = vunpack.c.l.b16 %v112
    %v612 = vunpack.c.l.b16 %v113
    %v613 = vunpack.c.l.b16 %v114
    %v614 = vunpack.c.l.b16 %v115
    %v615 = vunpack.c.l.b16 %v116
    %v616 = vunpack.c.l.b16 %v117
    %v617 = vunpack.c.l.b16 %v118
    %v618 = vunpack.c.l.b16 %v119
    %v619 = vunpack.c.l.b16 %v120
    %v620 = vpack.c.b16 %v605, %v604
    %v621 = vpack.c.b16 %v607, %v606
    %v622 = vpack.c.b16 %v609, %v608
    %v623 = vpack.c.b16 %v611, %v610
    %v624 = vpack.c.b16 %v613, %v612
    %v625 = vpack.c.b16 %v615, %v614
    %v626 = vpack.c.b16 %v617, %v616
    %v627 = vpack.c.b16 %v619, %v618
    %636 = vmatprep.subr.bf16.mxu0 0
    %637 = vmatpush1.bf16.msra.mxu0 %v620
    %638 = vmatprep.subr.bf16.mxu0 0
    %639 = vmatpush1.bf16.msra.mxu0 %v621
    %640 = vmatprep.subr.bf16.mxu0 0
    %641 = vmatpush1.bf16.msra.mxu0 %v622
    %642 = vmatprep.subr.bf16.mxu0 0
    %643 = vmatpush1.bf16.msra.mxu0 %v623
    %644 = vmatprep.subr.bf16.mxu0 0
    %645 = vmatpush1.bf16.msra.mxu0 %v624
    %646 = vmatprep.subr.bf16.mxu0 0
    %647 = vmatpush1.bf16.msra.mxu0 %v625
    %648 = vmatprep.subr.bf16.mxu0 0
    %649 = vmatpush1.bf16.msra.mxu0 %v626
    %650 = vmatprep.subr.bf16.mxu0 0
    %651 = vmatpush1.bf16.msra.mxu0 %v627
    %652 = vmatprep.subr.bf16.mxu0 0
    %653 = vmatpush1.bf16.msra.mxu0 0
    %654 = vmatprep.subr.bf16.mxu0 0
    %655 = vmatpush1.bf16.msra.mxu0 0
    %656 = vmatprep.subr.bf16.mxu0 0
    %657 = vmatpush1.bf16.msra.mxu0 0
    %658 = vmatprep.subr.bf16.mxu0 0
    %659 = vmatpush1.bf16.msra.mxu0 0
    %660 = vmatprep.subr.bf16.mxu0 0
    %661 = vmatpush1.bf16.msra.mxu0 0
    %662 = vmatprep.subr.bf16.mxu0 0
    %663 = vmatpush1.bf16.msra.mxu0 0
    %664 = vmatprep.subr.bf16.mxu0 0
    %665 = vmatpush1.bf16.msra.mxu0 0
    %666 = vmatprep.subr.bf16.mxu0 0
    %667 = vmatpush1.bf16.msra.mxu0 0
    %668 = vmatprep.mubr.bf16.mxu0 0
    %669 = vmatmul.mubr.bf16.gmra.mrb[0].mxu0 %v572
    %v670 = vpop.f32.mrb[0].mxu0
    %v671 = vadd.f32 0.0, %v670
    %v672 = vpop.f32.mrb[0].mxu0
    %v673 = vpop.f32.mrb[0].mxu0
    %v674 = vadd.f32 0.0, %v673
    %v675 = vpop.f32.mrb[0].mxu0
    %676 = vmatprep.mubr.bf16.mxu0 0
    %677 = vmatmul.mubr.bf16.gmra.mrb[0].mxu0 %v573
    %v678 = vpop.f32.mrb[0].mxu0
    %v679 = vadd.f32 0.0, %v678
    %v680 = vpop.f32.mrb[0].mxu0
    %v681 = vpop.f32.mrb[0].mxu0
    %v682 = vadd.f32 0.0, %v681
    %v683 = vpop.f32.mrb[0].mxu0
    %684 = vmatprep.mubr.bf16.mxu0 0
    %685 = vmatmul.mubr.bf16.gmra.mrb[0].mxu0 %v574
    %v686 = vpop.f32.mrb[0].mxu0
    %v687 = vadd.f32 0.0, %v686
    %v688 = vpop.f32.mrb[0].mxu0
    %v689 = vpop.f32.mrb[0].mxu0
    %v690 = vadd.f32 0.0, %v689
    %v691 = vpop.f32.mrb[0].mxu0
    %692 = vmatprep.mubr.bf16.mxu0 0
    %693 = vmatmul.mubr.bf16.gmra.mrb[0].mxu0 %v575
    %v694 = vpop.f32.mrb[0].mxu0
    %v695 = vadd.f32 0.0, %v694
    %v696 = vpop.f32.mrb[0].mxu0
    %v697 = vpop.f32.mrb[0].mxu0
    %v698 = vadd.f32 0.0, %v697
    %v699 = vpop.f32.mrb[0].mxu0
    %700 = vmatprep.mubr.bf16.mxu0 0
    %701 = vmatmul.mubr.bf16.gmra.mrb[0].mxu0 %v576
    %v702 = vpop.f32.mrb[0].mxu0
    %v703 = vadd.f32 0.0, %v702
    %v704 = vpop.f32.mrb[0].mxu0
    %v705 = vpop.f32.mrb[0].mxu0
    %v706 = vadd.f32 0.0, %v705
    %v707 = vpop.f32.mrb[0].mxu0
    %708 = vmatprep.mubr.bf16.mxu0 0
    %709 = vmatmul.mubr.bf16.gmra.mrb[0].mxu0 %v577
    %v710 = vpop.f32.mrb[0].mxu0
    %v711 = vadd.f32 0.0, %v710
    %v712 = vpop.f32.mrb[0].mxu0
    %v713 = vpop.f32.mrb[0].mxu0
    %v714 = vadd.f32 0.0, %v713
    %v715 = vpop.f32.mrb[0].mxu0
    %716 = vmatprep.mubr.bf16.mxu0 0
    %717 = vmatmul.mubr.bf16.gmra.mrb[0].mxu0 %v578
    %v718 = vpop.f32.mrb[0].mxu0
    %v719 = vadd.f32 0.0, %v718
    %v720 = vpop.f32.mrb[0].mxu0
    %v721 = vpop.f32.mrb[0].mxu0
    %v722 = vadd.f32 0.0, %v721
    %v723 = vpop.f32.mrb[0].mxu0
    %724 = vmatprep.mubr.bf16.mxu0 0
    %725 = vmatmul.mubr.bf16.gmra.mrb[0].mxu0 %v579
    %v726 = vpop.f32.mrb[0].mxu0
    %v727 = vadd.f32 0.0, %v726
    %v728 = vpop.f32.mrb[0].mxu0
    %v729 = vpop.f32.mrb[0].mxu0
    %v730 = vadd.f32 0.0, %v729
    %v731 = vpop.f32.mrb[0].mxu0
    %732 = vmatprep.mubr.bf16.mxu0 0
    %733 = vmatmul.mubr.bf16.gmra.mrb[0].mxu0 %v580
    %v734 = vpop.f32.mrb[0].mxu0
    %v735 = vadd.f32 0.0, %v734
    %v736 = vpop.f32.mrb[0].mxu0
    %v737 = vpop.f32.mrb[0].mxu0
    %v738 = vadd.f32 0.0, %v737
    %v739 = vpop.f32.mrb[0].mxu0
    %740 = vmatprep.mubr.bf16.mxu0 0
    %741 = vmatmul.mubr.bf16.gmra.mrb[0].mxu0 %v581
    %v742 = vpop.f32.mrb[0].mxu0
    %v743 = vadd.f32 0.0, %v742
    %v744 = vpop.f32.mrb[0].mxu0
    %v745 = vpop.f32.mrb[0].mxu0
    %v746 = vadd.f32 0.0, %v745
    %v747 = vpop.f32.mrb[0].mxu0
    %748 = vmatprep.mubr.bf16.mxu0 0
    %749 = vmatmul.mubr.bf16.gmra.mrb[0].mxu0 %v582
    %v750 = vpop.f32.mrb[0].mxu0
    %v751 = vadd.f32 0.0, %v750
    %v752 = vpop.f32.mrb[0].mxu0
    %v753 = vpop.f32.mrb[0].mxu0
    %v754 = vadd.f32 0.0, %v753
    %v755 = vpop.f32.mrb[0].mxu0
    %756 = vmatprep.mubr.bf16.mxu0 0
    %757 = vmatmul.mubr.bf16.gmra.mrb[0].mxu0 %v583
    %v758 = vpop.f32.mrb[0].mxu0
    %v759 = vadd.f32 0.0, %v758
    %v760 = vpop.f32.mrb[0].mxu0
    %v761 = vpop.f32.mrb[0].mxu0
    %v762 = vadd.f32 0.0, %v761
    %v763 = vpop.f32.mrb[0].mxu0
    %764 = vmatprep.mubr.bf16.mxu0 0
    %765 = vmatmul.mubr.bf16.gmra.mrb[0].mxu0 %v584
    %v766 = vpop.f32.mrb[0].mxu0
    %v767 = vadd.f32 0.0, %v766
    %v768 = vpop.f32.mrb[0].mxu0
    %v769 = vpop.f32.mrb[0].mxu0
    %v770 = vadd.f32 0.0, %v769
    %v771 = vpop.f32.mrb[0].mxu0
    %772 = vmatprep.mubr.bf16.mxu0 0
    %773 = vmatmul.mubr.bf16.gmra.mrb[0].mxu0 %v585
    %v774 = vpop.f32.mrb[0].mxu0
    %v775 = vadd.f32 0.0, %v774
    %v776 = vpop.f32.mrb[0].mxu0
    %v777 = vpop.f32.mrb[0].mxu0
    %v778 = vadd.f32 0.0, %v777
    %v779 = vpop.f32.mrb[0].mxu0
    %780 = vmatprep.mubr.bf16.mxu0 0
    %781 = vmatmul.mubr.bf16.gmra.mrb[0].mxu0 %v586
    %v782 = vpop.f32.mrb[0].mxu0
    %v783 = vadd.f32 0.0, %v782
    %v784 = vpop.f32.mrb[0].mxu0
    %v785 = vpop.f32.mrb[0].mxu0
    %v786 = vadd.f32 0.0, %v785
    %v787 = vpop.f32.mrb[0].mxu0
    %788 = vmatprep.mubr.bf16.mxu0 0
    %789 = vmatmul.mubr.bf16.gmra.mrb[0].mxu0 %v587
    %v790 = vpop.f32.mrb[0].mxu0
    %v791 = vadd.f32 0.0, %v790
    %v792 = vpop.f32.mrb[0].mxu0
    %v793 = vpop.f32.mrb[0].mxu0
    %v794 = vadd.f32 0.0, %v793
    %v795 = vpop.f32.mrb[0].mxu0
    %796 = vdwg.mxu0
    %v798 = vlaneseq
    %v799 = vshrl.u32 %v798, 7
    %v800 = vsub.s32 0, %v799
    %v801 = vrot.slane %v121, %v800
    %v803 = vmul.f32 %v671, %v801
    %v804 = vmul.f32 %v674, %v801
    %v805 = vmul.f32 %v679, %v801
    %v806 = vmul.f32 %v682, %v801
    %v807 = vmul.f32 %v687, %v801
    %v808 = vmul.f32 %v690, %v801
    %v809 = vmul.f32 %v695, %v801
    %v810 = vmul.f32 %v698, %v801
    %v811 = vmul.f32 %v703, %v801
    %v812 = vmul.f32 %v706, %v801
    %v813 = vmul.f32 %v711, %v801
    %v814 = vmul.f32 %v714, %v801
    %v815 = vmul.f32 %v719, %v801
    %v816 = vmul.f32 %v722, %v801
    %v817 = vmul.f32 %v727, %v801
    %v818 = vmul.f32 %v730, %v801
    %v819 = vmul.f32 %v735, %v801
    %v820 = vmul.f32 %v738, %v801
    %v821 = vmul.f32 %v743, %v801
    %v822 = vmul.f32 %v746, %v801
    %v823 = vmul.f32 %v751, %v801
    %v824 = vmul.f32 %v754, %v801
    %v825 = vmul.f32 %v759, %v801
    %v826 = vmul.f32 %v762, %v801
    %v827 = vmul.f32 %v767, %v801
    %v828 = vmul.f32 %v770, %v801
    %v829 = vmul.f32 %v775, %v801
    %v830 = vmul.f32 %v778, %v801
    %v831 = vmul.f32 %v783, %v801
    %v832 = vmul.f32 %v786, %v801
    %v833 = vmul.f32 %v791, %v801
    %v834 = vmul.f32 %v794, %v801
    %v836 = vlaneseq
    %v837 = vshrl.u32 %v836, 7
    %v838 = vsub.s32 0, %v837
    %v839 = vrot.slane %v122, %v838
    %v841 = vadd.f32 %v803, %v839
    %v842 = vadd.f32 %v804, %v839
    %v843 = vadd.f32 %v805, %v839
    %v844 = vadd.f32 %v806, %v839
    %v845 = vadd.f32 %v807, %v839
    %v846 = vadd.f32 %v808, %v839
    %v847 = vadd.f32 %v809, %v839
    %v848 = vadd.f32 %v810, %v839
    %v849 = vadd.f32 %v811, %v839
    %v850 = vadd.f32 %v812, %v839
    %v851 = vadd.f32 %v813, %v839
    %v852 = vadd.f32 %v814, %v839
    %v853 = vadd.f32 %v815, %v839
    %v854 = vadd.f32 %v816, %v839
    %v855 = vadd.f32 %v817, %v839
    %v856 = vadd.f32 %v818, %v839
    %v857 = vadd.f32 %v819, %v839
    %v858 = vadd.f32 %v820, %v839
    %v859 = vadd.f32 %v821, %v839
    %v860 = vadd.f32 %v822, %v839
    %v861 = vadd.f32 %v823, %v839
    %v862 = vadd.f32 %v824, %v839
    %v863 = vadd.f32 %v825, %v839
    %v864 = vadd.f32 %v826, %v839
    %v865 = vadd.f32 %v827, %v839
    %v866 = vadd.f32 %v828, %v839
    %v867 = vadd.f32 %v829, %v839
    %v868 = vadd.f32 %v830, %v839
    %v869 = vadd.f32 %v831, %v839
    %v870 = vadd.f32 %v832, %v839
    %v871 = vadd.f32 %v833, %v839
    %v872 = vadd.f32 %v834, %v839
    %v873 = vmax.f32 %v841, 0.0
    %v874 = vmax.f32 %v842, 0.0
    %v875 = vmax.f32 %v843, 0.0
    %v876 = vmax.f32 %v844, 0.0
    %v877 = vmax.f32 %v845, 0.0
    %v878 = vmax.f32 %v846, 0.0
    %v879 = vmax.f32 %v847, 0.0
    %v880 = vmax.f32 %v848, 0.0
    %v881 = vmax.f32 %v849, 0.0
    %v882 = vmax.f32 %v850, 0.0
    %v883 = vmax.f32 %v851, 0.0
    %v884 = vmax.f32 %v852, 0.0
    %v885 = vmax.f32 %v853, 0.0
    %v886 = vmax.f32 %v854, 0.0
    %v887 = vmax.f32 %v855, 0.0
    %v888 = vmax.f32 %v856, 0.0
    %v889 = vmax.f32 %v857, 0.0
    %v890 = vmax.f32 %v858, 0.0
    %v891 = vmax.f32 %v859, 0.0
    %v892 = vmax.f32 %v860, 0.0
    %v893 = vmax.f32 %v861, 0.0
    %v894 = vmax.f32 %v862, 0.0
    %v895 = vmax.f32 %v863, 0.0
    %v896 = vmax.f32 %v864, 0.0
    %v897 = vmax.f32 %v865, 0.0
    %v898 = vmax.f32 %v866, 0.0
    %v899 = vmax.f32 %v867, 0.0
    %v900 = vmax.f32 %v868, 0.0
    %v901 = vmax.f32 %v869, 0.0
    %v902 = vmax.f32 %v870, 0.0
    %v903 = vmax.f32 %v871, 0.0
    %v904 = vmax.f32 %v872, 0.0
    %v905 = vpack.c.bf16 %v874, %v873
    %v906 = vpack.c.bf16 %v876, %v875
    %v907 = vpack.c.bf16 %v878, %v877
    %v908 = vpack.c.bf16 %v880, %v879
    %v909 = vpack.c.bf16 %v882, %v881
    %v910 = vpack.c.bf16 %v884, %v883
    %v911 = vpack.c.bf16 %v886, %v885
    %v912 = vpack.c.bf16 %v888, %v887
    %v913 = vpack.c.bf16 %v890, %v889
    %v914 = vpack.c.bf16 %v892, %v891
    %v915 = vpack.c.bf16 %v894, %v893
    %v916 = vpack.c.bf16 %v896, %v895
    %v917 = vpack.c.bf16 %v898, %v897
    %v918 = vpack.c.bf16 %v900, %v899
    %v919 = vpack.c.bf16 %v902, %v901
    %v920 = vpack.c.bf16 %v904, %v903
    %v921 = vld [vmem:[%s5] sm:$0xf]
    %v922 = vld [vmem:[%s5 + $0x4] sm:$0xf]
    %v923 = vld [vmem:[%s5 + $0x8] sm:$0xf]
    %v924 = vld [vmem:[%s5 + $0xc] sm:$0xf]
    %v925 = vld [vmem:[%s5 + $0x10] sm:$0xf]
    %v926 = vld [vmem:[%s5 + $0x14] sm:$0xf]
    %v927 = vld [vmem:[%s5 + $0x18] sm:$0xf]
    %v928 = vld [vmem:[%s5 + $0x1c] sm:$0xf]
    %v929 = vld [vmem:[%s5 + $0x20] sm:$0xf]
    %v930 = vld [vmem:[%s5 + $0x24] sm:$0xf]
    %v931 = vld [vmem:[%s5 + $0x28] sm:$0xf]
    %v932 = vld [vmem:[%s5 + $0x2c] sm:$0xf]
    %v933 = vld [vmem:[%s5 + $0x30] sm:$0xf]
    %v934 = vld [vmem:[%s5 + $0x34] sm:$0xf]
    %v935 = vld [vmem:[%s5 + $0x38] sm:$0xf]
    %v936 = vld [vmem:[%s5 + $0x3c] sm:$0xf]
    %v937 = vld [vmem:[%s6] sm:$0x1]
    %v938 = vld [vmem:[%s7] sm:$0x1]
    %939 = vmatprep.subr.bf16.mxu0 0
    %940 = vmatpush1.bf16.msra.mxu0 %v905
    %941 = vmatprep.subr.bf16.mxu0 0
    %942 = vmatpush1.bf16.msra.mxu0 %v906
    %943 = vmatprep.subr.bf16.mxu0 0
    %944 = vmatpush1.bf16.msra.mxu0 %v907
    %945 = vmatprep.subr.bf16.mxu0 0
    %946 = vmatpush1.bf16.msra.mxu0 %v908
    %947 = vmatprep.subr.bf16.mxu0 0
    %948 = vmatpush1.bf16.msra.mxu0 %v909
    %949 = vmatprep.subr.bf16.mxu0 0
    %950 = vmatpush1.bf16.msra.mxu0 %v910
    %951 = vmatprep.subr.bf16.mxu0 0
    %952 = vmatpush1.bf16.msra.mxu0 %v911
    %953 = vmatprep.subr.bf16.mxu0 0
    %954 = vmatpush1.bf16.msra.mxu0 %v912
    %955 = vmatprep.subr.bf16.mxu0 0
    %956 = vmatpush1.bf16.msra.mxu0 %v913
    %957 = vmatprep.subr.bf16.mxu0 0
    %958 = vmatpush1.bf16.msra.mxu0 %v914
    %959 = vmatprep.subr.bf16.mxu0 0
    %960 = vmatpush1.bf16.msra.mxu0 %v915
    %961 = vmatprep.subr.bf16.mxu0 0
    %962 = vmatpush1.bf16.msra.mxu0 %v916
    %963 = vmatprep.subr.bf16.mxu0 0
    %964 = vmatpush1.bf16.msra.mxu0 %v917
    %965 = vmatprep.subr.bf16.mxu0 0
    %966 = vmatpush1.bf16.msra.mxu0 %v918
    %967 = vmatprep.subr.bf16.mxu0 0
    %968 = vmatpush1.bf16.msra.mxu0 %v919
    %969 = vmatprep.subr.bf16.mxu0 0
    %970 = vmatpush1.bf16.msra.mxu0 %v920
    %971 = vmatprep.mubr.bf16.mxu0 %v252
    %972 = vmatmul.mubr.bf16.gmra.mrb[0].mxu0 %v251
    %v973 = vpop.f32.mrb[0].mxu0
    %v974 = vadd.f32 0.0, %v973
    %v975 = vpop.f32.mrb[0].mxu0
    %v976 = vpop.f32.mrb[0].mxu0
    %v977 = vadd.f32 0.0, %v976
    %v978 = vpop.f32.mrb[0].mxu0
    %979 = vmatprep.mubr.bf16.mxu0 %v254
    %980 = vmatmul.mubr.bf16.gmra.mrb[0].mxu0 %v253
    %v981 = vpop.f32.mrb[0].mxu0
    %v982 = vadd.f32 0.0, %v981
    %v983 = vpop.f32.mrb[0].mxu0
    %v984 = vpop.f32.mrb[0].mxu0
    %v985 = vadd.f32 0.0, %v984
    %v986 = vpop.f32.mrb[0].mxu0
    %987 = vmatprep.mubr.bf16.mxu0 %v256
    %988 = vmatmul.mubr.bf16.gmra.mrb[0].mxu0 %v255
    %v989 = vpop.f32.mrb[0].mxu0
    %v990 = vadd.f32 0.0, %v989
    %v991 = vpop.f32.mrb[0].mxu0
    %v992 = vpop.f32.mrb[0].mxu0
    %v993 = vadd.f32 0.0, %v992
    %v994 = vpop.f32.mrb[0].mxu0
    %995 = vmatprep.mubr.bf16.mxu0 %v258
    %996 = vmatmul.mubr.bf16.gmra.mrb[0].mxu0 %v257
    %v997 = vpop.f32.mrb[0].mxu0
    %v998 = vadd.f32 0.0, %v997
    %v999 = vpop.f32.mrb[0].mxu0
    %v1000 = vpop.f32.mrb[0].mxu0
    %v1001 = vadd.f32 0.0, %v1000
    %v1002 = vpop.f32.mrb[0].mxu0
    %1003 = vmatprep.mubr.bf16.mxu0 %v260
    %1004 = vmatmul.mubr.bf16.gmra.mrb[0].mxu0 %v259
    %v1005 = vpop.f32.mrb[0].mxu0
    %v1006 = vadd.f32 0.0, %v1005
    %v1007 = vpop.f32.mrb[0].mxu0
    %v1008 = vpop.f32.mrb[0].mxu0
    %v1009 = vadd.f32 0.0, %v1008
    %v1010 = vpop.f32.mrb[0].mxu0
    %1011 = vmatprep.mubr.bf16.mxu0 %v262
    %1012 = vmatmul.mubr.bf16.gmra.mrb[0].mxu0 %v261
    %v1013 = vpop.f32.mrb[0].mxu0
    %v1014 = vadd.f32 0.0, %v1013
    %v1015 = vpop.f32.mrb[0].mxu0
    %v1016 = vpop.f32.mrb[0].mxu0
    %v1017 = vadd.f32 0.0, %v1016
    %v1018 = vpop.f32.mrb[0].mxu0
    %1019 = vmatprep.mubr.bf16.mxu0 %v264
    %1020 = vmatmul.mubr.bf16.gmra.mrb[0].mxu0 %v263
    %v1021 = vpop.f32.mrb[0].mxu0
    %v1022 = vadd.f32 0.0, %v1021
    %v1023 = vpop.f32.mrb[0].mxu0
    %v1024 = vpop.f32.mrb[0].mxu0
    %v1025 = vadd.f32 0.0, %v1024
    %v1026 = vpop.f32.mrb[0].mxu0
    %1027 = vmatprep.mubr.bf16.mxu0 %v266
    %1028 = vmatmul.mubr.bf16.gmra.mrb[0].mxu0 %v265
    %v1029 = vpop.f32.mrb[0].mxu0
    %v1030 = vadd.f32 0.0, %v1029
    %v1031 = vpop.f32.mrb[0].mxu0
    %v1032 = vpop.f32.mrb[0].mxu0
    %v1033 = vadd.f32 0.0, %v1032
    %v1034 = vpop.f32.mrb[0].mxu0
    %1035 = vmatprep.mubr.bf16.mxu0 %v268
    %1036 = vmatmul.mubr.bf16.gmra.mrb[0].mxu0 %v267
    %v1037 = vpop.f32.mrb[0].mxu0
    %v1038 = vadd.f32 0.0, %v1037
    %v1039 = vpop.f32.mrb[0].mxu0
    %v1040 = vpop.f32.mrb[0].mxu0
    %v1041 = vadd.f32 0.0, %v1040
    %v1042 = vpop.f32.mrb[0].mxu0
    %1043 = vmatprep.mubr.bf16.mxu0 %v270
    %1044 = vmatmul.mubr.bf16.gmra.mrb[0].mxu0 %v269
    %v1045 = vpop.f32.mrb[0].mxu0
    %v1046 = vadd.f32 0.0, %v1045
    %v1047 = vpop.f32.mrb[0].mxu0
    %v1048 = vpop.f32.mrb[0].mxu0
    %v1049 = vadd.f32 0.0, %v1048
    %v1050 = vpop.f32.mrb[0].mxu0
    %1051 = vmatprep.mubr.bf16.mxu0 %v272
    %1052 = vmatmul.mubr.bf16.gmra.mrb[0].mxu0 %v271
    %v1053 = vpop.f32.mrb[0].mxu0
    %v1054 = vadd.f32 0.0, %v1053
    %v1055 = vpop.f32.mrb[0].mxu0
    %v1056 = vpop.f32.mrb[0].mxu0
    %v1057 = vadd.f32 0.0, %v1056
    %v1058 = vpop.f32.mrb[0].mxu0
    %1059 = vmatprep.mubr.bf16.mxu0 %v274
    %1060 = vmatmul.mubr.bf16.gmra.mrb[0].mxu0 %v273
    %v1061 = vpop.f32.mrb[0].mxu0
    %v1062 = vadd.f32 0.0, %v1061
    %v1063 = vpop.f32.mrb[0].mxu0
    %v1064 = vpop.f32.mrb[0].mxu0
    %v1065 = vadd.f32 0.0, %v1064
    %v1066 = vpop.f32.mrb[0].mxu0
    %1067 = vmatprep.mubr.bf16.mxu0 %v276
    %1068 = vmatmul.mubr.bf16.gmra.mrb[0].mxu0 %v275
    %v1069 = vpop.f32.mrb[0].mxu0
    %v1070 = vadd.f32 0.0, %v1069
    %v1071 = vpop.f32.mrb[0].mxu0
    %v1072 = vpop.f32.mrb[0].mxu0
    %v1073 = vadd.f32 0.0, %v1072
    %v1074 = vpop.f32.mrb[0].mxu0
    %1075 = vmatprep.mubr.bf16.mxu0 %v278
    %1076 = vmatmul.mubr.bf16.gmra.mrb[0].mxu0 %v277
    %v1077 = vpop.f32.mrb[0].mxu0
    %v1078 = vadd.f32 0.0, %v1077
    %v1079 = vpop.f32.mrb[0].mxu0
    %v1080 = vpop.f32.mrb[0].mxu0
    %v1081 = vadd.f32 0.0, %v1080
    %v1082 = vpop.f32.mrb[0].mxu0
    %1083 = vmatprep.mubr.bf16.mxu0 %v280
    %1084 = vmatmul.mubr.bf16.gmra.mrb[0].mxu0 %v279
    %v1085 = vpop.f32.mrb[0].mxu0
    %v1086 = vadd.f32 0.0, %v1085
    %v1087 = vpop.f32.mrb[0].mxu0
    %v1088 = vpop.f32.mrb[0].mxu0
    %v1089 = vadd.f32 0.0, %v1088
    %v1090 = vpop.f32.mrb[0].mxu0
    %1091 = vmatprep.mubr.bf16.mxu0 %v282
    %1092 = vmatmul.mubr.bf16.gmra.mrb[0].mxu0 %v281
    %v1093 = vpop.f32.mrb[0].mxu0
    %v1094 = vadd.f32 0.0, %v1093
    %v1095 = vpop.f32.mrb[0].mxu0
    %v1096 = vpop.f32.mrb[0].mxu0
    %v1097 = vadd.f32 0.0, %v1096
    %v1098 = vpop.f32.mrb[0].mxu0
    %1099 = vdwg.mxu0
    %v1100 = vpack.c.bf16 %v977, %v974
    %v1101 = vpack.c.bf16 %v985, %v982
    %v1102 = vpack.c.bf16 %v993, %v990
    %v1103 = vpack.c.bf16 %v1001, %v998
    %v1104 = vpack.c.bf16 %v1009, %v1006
    %v1105 = vpack.c.bf16 %v1017, %v1014
    %v1106 = vpack.c.bf16 %v1025, %v1022
    %v1107 = vpack.c.bf16 %v1033, %v1030
    %v1108 = vpack.c.bf16 %v1041, %v1038
    %v1109 = vpack.c.bf16 %v1049, %v1046
    %v1110 = vpack.c.bf16 %v1057, %v1054
    %v1111 = vpack.c.bf16 %v1065, %v1062
    %v1112 = vpack.c.bf16 %v1073, %v1070
    %v1113 = vpack.c.bf16 %v1081, %v1078
    %v1114 = vpack.c.bf16 %v1089, %v1086
    %v1115 = vpack.c.bf16 %v1097, %v1094
    %v1132 = vunpack.c.l.b16 %v921
    %v1133 = vunpack.c.l.b16 %v922
    %v1134 = vunpack.c.l.b16 %v923
    %v1135 = vunpack.c.l.b16 %v924
    %v1136 = vunpack.c.l.b16 %v925
    %v1137 = vunpack.c.l.b16 %v926
    %v1138 = vunpack.c.l.b16 %v927
    %v1139 = vunpack.c.l.b16 %v928
    %v1140 = vunpack.c.l.b16 %v929
    %v1141 = vunpack.c.l.b16 %v930
    %v1142 = vunpack.c.l.b16 %v931
    %v1143 = vunpack.c.l.b16 %v932
    %v1144 = vunpack.c.l.b16 %v933
    %v1145 = vunpack.c.l.b16 %v934
    %v1146 = vunpack.c.l.b16 %v935
    %v1147 = vunpack.c.l.b16 %v936
    %v1148 = vpack.c.b16 %v1133, %v1132
    %v1149 = vpack.c.b16 %v1135, %v1134
    %v1150 = vpack.c.b16 %v1137, %v1136
    %v1151 = vpack.c.b16 %v1139, %v1138
    %v1152 = vpack.c.b16 %v1141, %v1140
    %v1153 = vpack.c.b16 %v1143, %v1142
    %v1154 = vpack.c.b16 %v1145, %v1144
    %v1155 = vpack.c.b16 %v1147, %v1146
    %1164 = vmatprep.subr.bf16.mxu0 0
    %1165 = vmatpush1.bf16.msra.mxu0 %v1148
    %1166 = vmatprep.subr.bf16.mxu0 0
    %1167 = vmatpush1.bf16.msra.mxu0 %v1149
    %1168 = vmatprep.subr.bf16.mxu0 0
    %1169 = vmatpush1.bf16.msra.mxu0 %v1150
    %1170 = vmatprep.subr.bf16.mxu0 0
    %1171 = vmatpush1.bf16.msra.mxu0 %v1151
    %1172 = vmatprep.subr.bf16.mxu0 0
    %1173 = vmatpush1.bf16.msra.mxu0 %v1152
    %1174 = vmatprep.subr.bf16.mxu0 0
    %1175 = vmatpush1.bf16.msra.mxu0 %v1153
    %1176 = vmatprep.subr.bf16.mxu0 0
    %1177 = vmatpush1.bf16.msra.mxu0 %v1154
    %1178 = vmatprep.subr.bf16.mxu0 0
    %1179 = vmatpush1.bf16.msra.mxu0 %v1155
    %1180 = vmatprep.subr.bf16.mxu0 0
    %1181 = vmatpush1.bf16.msra.mxu0 0
    %1182 = vmatprep.subr.bf16.mxu0 0
    %1183 = vmatpush1.bf16.msra.mxu0 0
    %1184 = vmatprep.subr.bf16.mxu0 0
    %1185 = vmatpush1.bf16.msra.mxu0 0
    %1186 = vmatprep.subr.bf16.mxu0 0
    %1187 = vmatpush1.bf16.msra.mxu0 0
    %1188 = vmatprep.subr.bf16.mxu0 0
    %1189 = vmatpush1.bf16.msra.mxu0 0
    %1190 = vmatprep.subr.bf16.mxu0 0
    %1191 = vmatpush1.bf16.msra.mxu0 0
    %1192 = vmatprep.subr.bf16.mxu0 0
    %1193 = vmatpush1.bf16.msra.mxu0 0
    %1194 = vmatprep.subr.bf16.mxu0 0
    %1195 = vmatpush1.bf16.msra.mxu0 0
    %1196 = vmatprep.mubr.bf16.mxu0 0
    %1197 = vmatmul.mubr.bf16.gmra.mrb[0].mxu0 %v1100
    %v1198 = vpop.f32.mrb[0].mxu0
    %v1199 = vadd.f32 0.0, %v1198
    %v1200 = vpop.f32.mrb[0].mxu0
    %v1201 = vpop.f32.mrb[0].mxu0
    %v1202 = vadd.f32 0.0, %v1201
    %v1203 = vpop.f32.mrb[0].mxu0
    %1204 = vmatprep.mubr.bf16.mxu0 0
    %1205 = vmatmul.mubr.bf16.gmra.mrb[0].mxu0 %v1101
    %v1206 = vpop.f32.mrb[0].mxu0
    %v1207 = vadd.f32 0.0, %v1206
    %v1208 = vpop.f32.mrb[0].mxu0
    %v1209 = vpop.f32.mrb[0].mxu0
    %v1210 = vadd.f32 0.0, %v1209
    %v1211 = vpop.f32.mrb[0].mxu0
    %1212 = vmatprep.mubr.bf16.mxu0 0
    %1213 = vmatmul.mubr.bf16.gmra.mrb[0].mxu0 %v1102
    %v1214 = vpop.f32.mrb[0].mxu0
    %v1215 = vadd.f32 0.0, %v1214
    %v1216 = vpop.f32.mrb[0].mxu0
    %v1217 = vpop.f32.mrb[0].mxu0
    %v1218 = vadd.f32 0.0, %v1217
    %v1219 = vpop.f32.mrb[0].mxu0
    %1220 = vmatprep.mubr.bf16.mxu0 0
    %1221 = vmatmul.mubr.bf16.gmra.mrb[0].mxu0 %v1103
    %v1222 = vpop.f32.mrb[0].mxu0
    %v1223 = vadd.f32 0.0, %v1222
    %v1224 = vpop.f32.mrb[0].mxu0
    %v1225 = vpop.f32.mrb[0].mxu0
    %v1226 = vadd.f32 0.0, %v1225
    %v1227 = vpop.f32.mrb[0].mxu0
    %1228 = vmatprep.mubr.bf16.mxu0 0
    %1229 = vmatmul.mubr.bf16.gmra.mrb[0].mxu0 %v1104
    %v1230 = vpop.f32.mrb[0].mxu0
    %v1231 = vadd.f32 0.0, %v1230
    %v1232 = vpop.f32.mrb[0].mxu0
    %v1233 = vpop.f32.mrb[0].mxu0
    %v1234 = vadd.f32 0.0, %v1233
    %v1235 = vpop.f32.mrb[0].mxu0
    %1236 = vmatprep.mubr.bf16.mxu0 0
    %1237 = vmatmul.mubr.bf16.gmra.mrb[0].mxu0 %v1105
    %v1238 = vpop.f32.mrb[0].mxu0
    %v1239 = vadd.f32 0.0, %v1238
    %v1240 = vpop.f32.mrb[0].mxu0
    %v1241 = vpop.f32.mrb[0].mxu0
    %v1242 = vadd.f32 0.0, %v1241
    %v1243 = vpop.f32.mrb[0].mxu0
    %1244 = vmatprep.mubr.bf16.mxu0 0
    %1245 = vmatmul.mubr.bf16.gmra.mrb[0].mxu0 %v1106
    %v1246 = vpop.f32.mrb[0].mxu0
    %v1247 = vadd.f32 0.0, %v1246
    %v1248 = vpop.f32.mrb[0].mxu0
    %v1249 = vpop.f32.mrb[0].mxu0
    %v1250 = vadd.f32 0.0, %v1249
    %v1251 = vpop.f32.mrb[0].mxu0
    %1252 = vmatprep.mubr.bf16.mxu0 0
    %1253 = vmatmul.mubr.bf16.gmra.mrb[0].mxu0 %v1107
    %v1254 = vpop.f32.mrb[0].mxu0
    %v1255 = vadd.f32 0.0, %v1254
    %v1256 = vpop.f32.mrb[0].mxu0
    %v1257 = vpop.f32.mrb[0].mxu0
    %v1258 = vadd.f32 0.0, %v1257
    %v1259 = vpop.f32.mrb[0].mxu0
    %1260 = vmatprep.mubr.bf16.mxu0 0
    %1261 = vmatmul.mubr.bf16.gmra.mrb[0].mxu0 %v1108
    %v1262 = vpop.f32.mrb[0].mxu0
    %v1263 = vadd.f32 0.0, %v1262
    %v1264 = vpop.f32.mrb[0].mxu0
    %v1265 = vpop.f32.mrb[0].mxu0
    %v1266 = vadd.f32 0.0, %v1265
    %v1267 = vpop.f32.mrb[0].mxu0
    %1268 = vmatprep.mubr.bf16.mxu0 0
    %1269 = vmatmul.mubr.bf16.gmra.mrb[0].mxu0 %v1109
    %v1270 = vpop.f32.mrb[0].mxu0
    %v1271 = vadd.f32 0.0, %v1270
    %v1272 = vpop.f32.mrb[0].mxu0
    %v1273 = vpop.f32.mrb[0].mxu0
    %v1274 = vadd.f32 0.0, %v1273
    %v1275 = vpop.f32.mrb[0].mxu0
    %1276 = vmatprep.mubr.bf16.mxu0 0
    %1277 = vmatmul.mubr.bf16.gmra.mrb[0].mxu0 %v1110
    %v1278 = vpop.f32.mrb[0].mxu0
    %v1279 = vadd.f32 0.0, %v1278
    %v1280 = vpop.f32.mrb[0].mxu0
    %v1281 = vpop.f32.mrb[0].mxu0
    %v1282 = vadd.f32 0.0, %v1281
    %v1283 = vpop.f32.mrb[0].mxu0
    %1284 = vmatprep.mubr.bf16.mxu0 0
    %1285 = vmatmul.mubr.bf16.gmra.mrb[0].mxu0 %v1111
    %v1286 = vpop.f32.mrb[0].mxu0
    %v1287 = vadd.f32 0.0, %v1286
    %v1288 = vpop.f32.mrb[0].mxu0
    %v1289 = vpop.f32.mrb[0].mxu0
    %v1290 = vadd.f32 0.0, %v1289
    %v1291 = vpop.f32.mrb[0].mxu0
    %1292 = vmatprep.mubr.bf16.mxu0 0
    %1293 = vmatmul.mubr.bf16.gmra.mrb[0].mxu0 %v1112
    %v1294 = vpop.f32.mrb[0].mxu0
    %v1295 = vadd.f32 0.0, %v1294
    %v1296 = vpop.f32.mrb[0].mxu0
    %v1297 = vpop.f32.mrb[0].mxu0
    %v1298 = vadd.f32 0.0, %v1297
    %v1299 = vpop.f32.mrb[0].mxu0
    %1300 = vmatprep.mubr.bf16.mxu0 0
    %1301 = vmatmul.mubr.bf16.gmra.mrb[0].mxu0 %v1113
    %v1302 = vpop.f32.mrb[0].mxu0
    %v1303 = vadd.f32 0.0, %v1302
    %v1304 = vpop.f32.mrb[0].mxu0
    %v1305 = vpop.f32.mrb[0].mxu0
    %v1306 = vadd.f32 0.0, %v1305
    %v1307 = vpop.f32.mrb[0].mxu0
    %1308 = vmatprep.mubr.bf16.mxu0 0
    %1309 = vmatmul.mubr.bf16.gmra.mrb[0].mxu0 %v1114
    %v1310 = vpop.f32.mrb[0].mxu0
    %v1311 = vadd.f32 0.0, %v1310
    %v1312 = vpop.f32.mrb[0].mxu0
    %v1313 = vpop.f32.mrb[0].mxu0
    %v1314 = vadd.f32 0.0, %v1313
    %v1315 = vpop.f32.mrb[0].mxu0
    %1316 = vmatprep.mubr.bf16.mxu0 0
    %1317 = vmatmul.mubr.bf16.gmra.mrb[0].mxu0 %v1115
    %v1318 = vpop.f32.mrb[0].mxu0
    %v1319 = vadd.f32 0.0, %v1318
    %v1320 = vpop.f32.mrb[0].mxu0
    %v1321 = vpop.f32.mrb[0].mxu0
    %v1322 = vadd.f32 0.0, %v1321
    %v1323 = vpop.f32.mrb[0].mxu0
    %1324 = vdwg.mxu0
    %v1326 = vlaneseq
    %v1327 = vshrl.u32 %v1326, 7
    %v1328 = vsub.s32 0, %v1327
    %v1329 = vrot.slane %v937, %v1328
    %v1331 = vmul.f32 %v1199, %v1329
    %v1332 = vmul.f32 %v1202, %v1329
    %v1333 = vmul.f32 %v1207, %v1329
    %v1334 = vmul.f32 %v1210, %v1329
    %v1335 = vmul.f32 %v1215, %v1329
    %v1336 = vmul.f32 %v1218, %v1329
    %v1337 = vmul.f32 %v1223, %v1329
    %v1338 = vmul.f32 %v1226, %v1329
    %v1339 = vmul.f32 %v1231, %v1329
    %v1340 = vmul.f32 %v1234, %v1329
    %v1341 = vmul.f32 %v1239, %v1329
    %v1342 = vmul.f32 %v1242, %v1329
    %v1343 = vmul.f32 %v1247, %v1329
    %v1344 = vmul.f32 %v1250, %v1329
    %v1345 = vmul.f32 %v1255, %v1329
    %v1346 = vmul.f32 %v1258, %v1329
    %v1347 = vmul.f32 %v1263, %v1329
    %v1348 = vmul.f32 %v1266, %v1329
    %v1349 = vmul.f32 %v1271, %v1329
    %v1350 = vmul.f32 %v1274, %v1329
    %v1351 = vmul.f32 %v1279, %v1329
    %v1352 = vmul.f32 %v1282, %v1329
    %v1353 = vmul.f32 %v1287, %v1329
    %v1354 = vmul.f32 %v1290, %v1329
    %v1355 = vmul.f32 %v1295, %v1329
    %v1356 = vmul.f32 %v1298, %v1329
    %v1357 = vmul.f32 %v1303, %v1329
    %v1358 = vmul.f32 %v1306, %v1329
    %v1359 = vmul.f32 %v1311, %v1329
    %v1360 = vmul.f32 %v1314, %v1329
    %v1361 = vmul.f32 %v1319, %v1329
    %v1362 = vmul.f32 %v1322, %v1329
    %v1364 = vlaneseq
    %v1365 = vshrl.u32 %v1364, 7
    %v1366 = vsub.s32 0, %v1365
    %v1367 = vrot.slane %v938, %v1366
    %v1369 = vadd.f32 %v1331, %v1367
    %v1370 = vadd.f32 %v1332, %v1367
    %v1371 = vadd.f32 %v1333, %v1367
    %v1372 = vadd.f32 %v1334, %v1367
    %v1373 = vadd.f32 %v1335, %v1367
    %v1374 = vadd.f32 %v1336, %v1367
    %v1375 = vadd.f32 %v1337, %v1367
    %v1376 = vadd.f32 %v1338, %v1367
    %v1377 = vadd.f32 %v1339, %v1367
    %v1378 = vadd.f32 %v1340, %v1367
    %v1379 = vadd.f32 %v1341, %v1367
    %v1380 = vadd.f32 %v1342, %v1367
    %v1381 = vadd.f32 %v1343, %v1367
    %v1382 = vadd.f32 %v1344, %v1367
    %v1383 = vadd.f32 %v1345, %v1367
    %v1384 = vadd.f32 %v1346, %v1367
    %v1385 = vadd.f32 %v1347, %v1367
    %v1386 = vadd.f32 %v1348, %v1367
    %v1387 = vadd.f32 %v1349, %v1367
    %v1388 = vadd.f32 %v1350, %v1367
    %v1389 = vadd.f32 %v1351, %v1367
    %v1390 = vadd.f32 %v1352, %v1367
    %v1391 = vadd.f32 %v1353, %v1367
    %v1392 = vadd.f32 %v1354, %v1367
    %v1393 = vadd.f32 %v1355, %v1367
    %v1394 = vadd.f32 %v1356, %v1367
    %v1395 = vadd.f32 %v1357, %v1367
    %v1396 = vadd.f32 %v1358, %v1367
    %v1397 = vadd.f32 %v1359, %v1367
    %v1398 = vadd.f32 %v1360, %v1367
    %v1399 = vadd.f32 %v1361, %v1367
    %v1400 = vadd.f32 %v1362, %v1367
    %v1401 = vmax.f32 %v1369, 0.0
    %v1402 = vmax.f32 %v1370, 0.0
    %v1403 = vmax.f32 %v1371, 0.0
    %v1404 = vmax.f32 %v1372, 0.0
    %v1405 = vmax.f32 %v1373, 0.0
    %v1406 = vmax.f32 %v1374, 0.0
    %v1407 = vmax.f32 %v1375, 0.0
    %v1408 = vmax.f32 %v1376, 0.0
    %v1409 = vmax.f32 %v1377, 0.0
    %v1410 = vmax.f32 %v1378, 0.0
    %v1411 = vmax.f32 %v1379, 0.0
    %v1412 = vmax.f32 %v1380, 0.0
    %v1413 = vmax.f32 %v1381, 0.0
    %v1414 = vmax.f32 %v1382, 0.0
    %v1415 = vmax.f32 %v1383, 0.0
    %v1416 = vmax.f32 %v1384, 0.0
    %v1417 = vmax.f32 %v1385, 0.0
    %v1418 = vmax.f32 %v1386, 0.0
    %v1419 = vmax.f32 %v1387, 0.0
    %v1420 = vmax.f32 %v1388, 0.0
    %v1421 = vmax.f32 %v1389, 0.0
    %v1422 = vmax.f32 %v1390, 0.0
    %v1423 = vmax.f32 %v1391, 0.0
    %v1424 = vmax.f32 %v1392, 0.0
    %v1425 = vmax.f32 %v1393, 0.0
    %v1426 = vmax.f32 %v1394, 0.0
    %v1427 = vmax.f32 %v1395, 0.0
    %v1428 = vmax.f32 %v1396, 0.0
    %v1429 = vmax.f32 %v1397, 0.0
    %v1430 = vmax.f32 %v1398, 0.0
    %v1431 = vmax.f32 %v1399, 0.0
    %v1432 = vmax.f32 %v1400, 0.0
    %v1433 = vpack.c.bf16 %v1402, %v1401
    %v1434 = vpack.c.bf16 %v1404, %v1403
    %v1435 = vpack.c.bf16 %v1406, %v1405
    %v1436 = vpack.c.bf16 %v1408, %v1407
    %v1437 = vpack.c.bf16 %v1410, %v1409
    %v1438 = vpack.c.bf16 %v1412, %v1411
    %v1439 = vpack.c.bf16 %v1414, %v1413
    %v1440 = vpack.c.bf16 %v1416, %v1415
    %v1441 = vpack.c.bf16 %v1418, %v1417
    %v1442 = vpack.c.bf16 %v1420, %v1419
    %v1443 = vpack.c.bf16 %v1422, %v1421
    %v1444 = vpack.c.bf16 %v1424, %v1423
    %v1445 = vpack.c.bf16 %v1426, %v1425
    %v1446 = vpack.c.bf16 %v1428, %v1427
    %v1447 = vpack.c.bf16 %v1430, %v1429
    %v1448 = vpack.c.bf16 %v1432, %v1431
    %v1449 = vld [vmem:[#allocation2] sm:$0xf]
    %v1450 = vld [vmem:[#allocation2 + $0x4] sm:$0xf]
    %v1451 = vld [vmem:[#allocation2 + $0x8] sm:$0xf]
    %v1452 = vld [vmem:[#allocation2 + $0xc] sm:$0xf]
    %v1453 = vld [vmem:[#allocation2 + $0x10] sm:$0xf]
    %v1454 = vld [vmem:[#allocation2 + $0x14] sm:$0xf]
    %v1455 = vld [vmem:[#allocation2 + $0x18] sm:$0xf]
    %v1456 = vld [vmem:[#allocation2 + $0x1c] sm:$0xf]
    %v1457 = vld [vmem:[#allocation2 + $0x20] sm:$0xf]
    %v1458 = vld [vmem:[#allocation2 + $0x24] sm:$0xf]
    %v1459 = vld [vmem:[#allocation2 + $0x28] sm:$0xf]
    %v1460 = vld [vmem:[#allocation2 + $0x2c] sm:$0xf]
    %v1461 = vld [vmem:[#allocation2 + $0x30] sm:$0xf]
    %v1462 = vld [vmem:[#allocation2 + $0x34] sm:$0xf]
    %v1463 = vld [vmem:[#allocation2 + $0x38] sm:$0xf]
    %v1464 = vld [vmem:[#allocation2 + $0x3c] sm:$0xf]
    %v1465 = vld [vmem:[%s9] sm:$0x1]
    %v1466 = vld [vmem:[%s10] sm:$0x1]
    %1467 = vmatprep.subr.bf16.mxu0 0
    %1468 = vmatpush1.bf16.msra.mxu0 %v1433
    %1469 = vmatprep.subr.bf16.mxu0 0
    %1470 = vmatpush1.bf16.msra.mxu0 %v1434
    %1471 = vmatprep.subr.bf16.mxu0 0
    %1472 = vmatpush1.bf16.msra.mxu0 %v1435
    %1473 = vmatprep.subr.bf16.mxu0 0
    %1474 = vmatpush1.bf16.msra.mxu0 %v1436
    %1475 = vmatprep.subr.bf16.mxu0 0
    %1476 = vmatpush1.bf16.msra.mxu0 %v1437
    %1477 = vmatprep.subr.bf16.mxu0 0
    %1478 = vmatpush1.bf16.msra.mxu0 %v1438
    %1479 = vmatprep.subr.bf16.mxu0 0
    %1480 = vmatpush1.bf16.msra.mxu0 %v1439
    %1481 = vmatprep.subr.bf16.mxu0 0
    %1482 = vmatpush1.bf16.msra.mxu0 %v1440
    %1483 = vmatprep.subr.bf16.mxu0 0
    %1484 = vmatpush1.bf16.msra.mxu0 %v1441
    %1485 = vmatprep.subr.bf16.mxu0 0
    %1486 = vmatpush1.bf16.msra.mxu0 %v1442
    %1487 = vmatprep.subr.bf16.mxu0 0
    %1488 = vmatpush1.bf16.msra.mxu0 %v1443
    %1489 = vmatprep.subr.bf16.mxu0 0
    %1490 = vmatpush1.bf16.msra.mxu0 %v1444
    %1491 = vmatprep.subr.bf16.mxu0 0
    %1492 = vmatpush1.bf16.msra.mxu0 %v1445
    %1493 = vmatprep.subr.bf16.mxu0 0
    %1494 = vmatpush1.bf16.msra.mxu0 %v1446
    %1495 = vmatprep.subr.bf16.mxu0 0
    %1496 = vmatpush1.bf16.msra.mxu0 %v1447
    %1497 = vmatprep.subr.bf16.mxu0 0
    %1498 = vmatpush1.bf16.msra.mxu0 %v1448
    %1499 = vmatprep.mubr.bf16.mxu0 %v252
    %1500 = vmatmul.mubr.bf16.gmra.mrb[0].mxu0 %v251
    %v1501 = vpop.f32.mrb[0].mxu0
    %v1502 = vadd.f32 0.0, %v1501
    %v1503 = vpop.f32.mrb[0].mxu0
    %v1504 = vpop.f32.mrb[0].mxu0
    %v1505 = vadd.f32 0.0, %v1504
    %v1506 = vpop.f32.mrb[0].mxu0
    %1507 = vmatprep.mubr.bf16.mxu0 %v254
    %1508 = vmatmul.mubr.bf16.gmra.mrb[0].mxu0 %v253
    %v1509 = vpop.f32.mrb[0].mxu0
    %v1510 = vadd.f32 0.0, %v1509
    %v1511 = vpop.f32.mrb[0].mxu0
    %v1512 = vpop.f32.mrb[0].mxu0
    %v1513 = vadd.f32 0.0, %v1512
    %v1514 = vpop.f32.mrb[0].mxu0
    %1515 = vmatprep.mubr.bf16.mxu0 %v256
    %1516 = vmatmul.mubr.bf16.gmra.mrb[0].mxu0 %v255
    %v1517 = vpop.f32.mrb[0].mxu0
    %v1518 = vadd.f32 0.0, %v1517
    %v1519 = vpop.f32.mrb[0].mxu0
    %v1520 = vpop.f32.mrb[0].mxu0
    %v1521 = vadd.f32 0.0, %v1520
    %v1522 = vpop.f32.mrb[0].mxu0
    %1523 = vmatprep.mubr.bf16.mxu0 %v258
    %1524 = vmatmul.mubr.bf16.gmra.mrb[0].mxu0 %v257
    %v1525 = vpop.f32.mrb[0].mxu0
    %v1526 = vadd.f32 0.0, %v1525
    %v1527 = vpop.f32.mrb[0].mxu0
    %v1528 = vpop.f32.mrb[0].mxu0
    %v1529 = vadd.f32 0.0, %v1528
    %v1530 = vpop.f32.mrb[0].mxu0
    %1531 = vmatprep.mubr.bf16.mxu0 %v260
    %1532 = vmatmul.mubr.bf16.gmra.mrb[0].mxu0 %v259
    %v1533 = vpop.f32.mrb[0].mxu0
    %v1534 = vadd.f32 0.0, %v1533
    %v1535 = vpop.f32.mrb[0].mxu0
    %v1536 = vpop.f32.mrb[0].mxu0
    %v1537 = vadd.f32 0.0, %v1536
    %v1538 = vpop.f32.mrb[0].mxu0
    %1539 = vmatprep.mubr.bf16.mxu0 %v262
    %1540 = vmatmul.mubr.bf16.gmra.mrb[0].mxu0 %v261
    %v1541 = vpop.f32.mrb[0].mxu0
    %v1542 = vadd.f32 0.0, %v1541
    %v1543 = vpop.f32.mrb[0].mxu0
    %v1544 = vpop.f32.mrb[0].mxu0
    %v1545 = vadd.f32 0.0, %v1544
    %v1546 = vpop.f32.mrb[0].mxu0
    %1547 = vmatprep.mubr.bf16.mxu0 %v264
    %1548 = vmatmul.mubr.bf16.gmra.mrb[0].mxu0 %v263
    %v1549 = vpop.f32.mrb[0].mxu0
    %v1550 = vadd.f32 0.0, %v1549
    %v1551 = vpop.f32.mrb[0].mxu0
    %v1552 = vpop.f32.mrb[0].mxu0
    %v1553 = vadd.f32 0.0, %v1552
    %v1554 = vpop.f32.mrb[0].mxu0
    %1555 = vmatprep.mubr.bf16.mxu0 %v266
    %1556 = vmatmul.mubr.bf16.gmra.mrb[0].mxu0 %v265
    %v1557 = vpop.f32.mrb[0].mxu0
    %v1558 = vadd.f32 0.0, %v1557
    %v1559 = vpop.f32.mrb[0].mxu0
    %v1560 = vpop.f32.mrb[0].mxu0
    %v1561 = vadd.f32 0.0, %v1560
    %v1562 = vpop.f32.mrb[0].mxu0
    %1563 = vmatprep.mubr.bf16.mxu0 %v268
    %1564 = vmatmul.mubr.bf16.gmra.mrb[0].mxu0 %v267
    %v1565 = vpop.f32.mrb[0].mxu0
    %v1566 = vadd.f32 0.0, %v1565
    %v1567 = vpop.f32.mrb[0].mxu0
    %v1568 = vpop.f32.mrb[0].mxu0
    %v1569 = vadd.f32 0.0, %v1568
    %v1570 = vpop.f32.mrb[0].mxu0
    %1571 = vmatprep.mubr.bf16.mxu0 %v270
    %1572 = vmatmul.mubr.bf16.gmra.mrb[0].mxu0 %v269
    %v1573 = vpop.f32.mrb[0].mxu0
    %v1574 = vadd.f32 0.0, %v1573
    %v1575 = vpop.f32.mrb[0].mxu0
    %v1576 = vpop.f32.mrb[0].mxu0
    %v1577 = vadd.f32 0.0, %v1576
    %v1578 = vpop.f32.mrb[0].mxu0
    %1579 = vmatprep.mubr.bf16.mxu0 %v272
    %1580 = vmatmul.mubr.bf16.gmra.mrb[0].mxu0 %v271
    %v1581 = vpop.f32.mrb[0].mxu0
    %v1582 = vadd.f32 0.0, %v1581
    %v1583 = vpop.f32.mrb[0].mxu0
    %v1584 = vpop.f32.mrb[0].mxu0
    %v1585 = vadd.f32 0.0, %v1584
    %v1586 = vpop.f32.mrb[0].mxu0
    %1587 = vmatprep.mubr.bf16.mxu0 %v274
    %1588 = vmatmul.mubr.bf16.gmra.mrb[0].mxu0 %v273
    %v1589 = vpop.f32.mrb[0].mxu0
    %v1590 = vadd.f32 0.0, %v1589
    %v1591 = vpop.f32.mrb[0].mxu0
    %v1592 = vpop.f32.mrb[0].mxu0
    %v1593 = vadd.f32 0.0, %v1592
    %v1594 = vpop.f32.mrb[0].mxu0
    %1595 = vmatprep.mubr.bf16.mxu0 %v276
    %1596 = vmatmul.mubr.bf16.gmra.mrb[0].mxu0 %v275
    %v1597 = vpop.f32.mrb[0].mxu0
    %v1598 = vadd.f32 0.0, %v1597
    %v1599 = vpop.f32.mrb[0].mxu0
    %v1600 = vpop.f32.mrb[0].mxu0
    %v1601 = vadd.f32 0.0, %v1600
    %v1602 = vpop.f32.mrb[0].mxu0
    %1603 = vmatprep.mubr.bf16.mxu0 %v278
    %1604 = vmatmul.mubr.bf16.gmra.mrb[0].mxu0 %v277
    %v1605 = vpop.f32.mrb[0].mxu0
    %v1606 = vadd.f32 0.0, %v1605
    %v1607 = vpop.f32.mrb[0].mxu0
    %v1608 = vpop.f32.mrb[0].mxu0
    %v1609 = vadd.f32 0.0, %v1608
    %v1610 = vpop.f32.mrb[0].mxu0
    %1611 = vmatprep.mubr.bf16.mxu0 %v280
    %1612 = vmatmul.mubr.bf16.gmra.mrb[0].mxu0 %v279
    %v1613 = vpop.f32.mrb[0].mxu0
    %v1614 = vadd.f32 0.0, %v1613
    %v1615 = vpop.f32.mrb[0].mxu0
    %v1616 = vpop.f32.mrb[0].mxu0
    %v1617 = vadd.f32 0.0, %v1616
    %v1618 = vpop.f32.mrb[0].mxu0
    %1619 = vmatprep.mubr.bf16.mxu0 %v282
    %1620 = vmatmul.mubr.bf16.gmra.mrb[0].mxu0 %v281
    %v1621 = vpop.f32.mrb[0].mxu0
    %v1622 = vadd.f32 0.0, %v1621
    %v1623 = vpop.f32.mrb[0].mxu0
    %v1624 = vpop.f32.mrb[0].mxu0
    %v1625 = vadd.f32 0.0, %v1624
    %v1626 = vpop.f32.mrb[0].mxu0
    %1627 = vdwg.mxu0
    %v1628 = vpack.c.bf16 %v1505, %v1502
    %v1629 = vpack.c.bf16 %v1513, %v1510
    %v1630 = vpack.c.bf16 %v1521, %v1518
    %v1631 = vpack.c.bf16 %v1529, %v1526
    %v1632 = vpack.c.bf16 %v1537, %v1534
    %v1633 = vpack.c.bf16 %v1545, %v1542
    %v1634 = vpack.c.bf16 %v1553, %v1550
    %v1635 = vpack.c.bf16 %v1561, %v1558
    %v1636 = vpack.c.bf16 %v1569, %v1566
    %v1637 = vpack.c.bf16 %v1577, %v1574
    %v1638 = vpack.c.bf16 %v1585, %v1582
    %v1639 = vpack.c.bf16 %v1593, %v1590
    %v1640 = vpack.c.bf16 %v1601, %v1598
    %v1641 = vpack.c.bf16 %v1609, %v1606
    %v1642 = vpack.c.bf16 %v1617, %v1614
    %v1643 = vpack.c.bf16 %v1625, %v1622
    %v1660 = vunpack.c.l.b16 %v1449
    %v1661 = vunpack.c.l.b16 %v1450
    %v1662 = vunpack.c.l.b16 %v1451
    %v1663 = vunpack.c.l.b16 %v1452
    %v1664 = vunpack.c.l.b16 %v1453
    %v1665 = vunpack.c.l.b16 %v1454
    %v1666 = vunpack.c.l.b16 %v1455
    %v1667 = vunpack.c.l.b16 %v1456
    %v1668 = vunpack.c.l.b16 %v1457
    %v1669 = vunpack.c.l.b16 %v1458
    %v1670 = vunpack.c.l.b16 %v1459
    %v1671 = vunpack.c.l.b16 %v1460
    %v1672 = vunpack.c.l.b16 %v1461
    %v1673 = vunpack.c.l.b16 %v1462
    %v1674 = vunpack.c.l.b16 %v1463
    %v1675 = vunpack.c.l.b16 %v1464
    %v1676 = vpack.c.b16 %v1661, %v1660
    %v1677 = vpack.c.b16 %v1663, %v1662
    %v1678 = vpack.c.b16 %v1665, %v1664
    %v1679 = vpack.c.b16 %v1667, %v1666
    %v1680 = vpack.c.b16 %v1669, %v1668
    %v1681 = vpack.c.b16 %v1671, %v1670
    %v1682 = vpack.c.b16 %v1673, %v1672
    %v1683 = vpack.c.b16 %v1675, %v1674
    %1692 = vmatprep.subr.bf16.mxu0 0
    %1693 = vmatpush1.bf16.msra.mxu0 %v1676
    %1694 = vmatprep.subr.bf16.mxu0 0
    %1695 = vmatpush1.bf16.msra.mxu0 %v1677
    %1696 = vmatprep.subr.bf16.mxu0 0
    %1697 = vmatpush1.bf16.msra.mxu0 %v1678
    %1698 = vmatprep.subr.bf16.mxu0 0
    %1699 = vmatpush1.bf16.msra.mxu0 %v1679
    %1700 = vmatprep.subr.bf16.mxu0 0
    %1701 = vmatpush1.bf16.msra.mxu0 %v1680
    %1702 = vmatprep.subr.bf16.mxu0 0
    %1703 = vmatpush1.bf16.msra.mxu0 %v1681
    %1704 = vmatprep.subr.bf16.mxu0 0
    %1705 = vmatpush1.bf16.msra.mxu0 %v1682
    %1706 = vmatprep.subr.bf16.mxu0 0
    %1707 = vmatpush1.bf16.msra.mxu0 %v1683
    %1708 = vmatprep.subr.bf16.mxu0 0
    %1709 = vmatpush1.bf16.msra.mxu0 0
    %1710 = vmatprep.subr.bf16.mxu0 0
    %1711 = vmatpush1.bf16.msra.mxu0 0
    %1712 = vmatprep.subr.bf16.mxu0 0
    %1713 = vmatpush1.bf16.msra.mxu0 0
    %1714 = vmatprep.subr.bf16.mxu0 0
    %1715 = vmatpush1.bf16.msra.mxu0 0
    %1716 = vmatprep.subr.bf16.mxu0 0
    %1717 = vmatpush1.bf16.msra.mxu0 0
    %1718 = vmatprep.subr.bf16.mxu0 0
    %1719 = vmatpush1.bf16.msra.mxu0 0
    %1720 = vmatprep.subr.bf16.mxu0 0
    %1721 = vmatpush1.bf16.msra.mxu0 0
    %1722 = vmatprep.subr.bf16.mxu0 0
    %1723 = vmatpush1.bf16.msra.mxu0 0
    %1724 = vmatprep.mubr.bf16.mxu0 0
    %1725 = vmatmul.mubr.bf16.gmra.mrb[0].mxu0 %v1628
    %v1726 = vpop.f32.mrb[0].mxu0
    %v1727 = vadd.f32 0.0, %v1726
    %v1728 = vpop.f32.mrb[0].mxu0
    %v1729 = vpop.f32.mrb[0].mxu0
    %v1730 = vadd.f32 0.0, %v1729
    %v1731 = vpop.f32.mrb[0].mxu0
    %1732 = vmatprep.mubr.bf16.mxu0 0
    %1733 = vmatmul.mubr.bf16.gmra.mrb[0].mxu0 %v1629
    %v1734 = vpop.f32.mrb[0].mxu0
    %v1735 = vadd.f32 0.0, %v1734
    %v1736 = vpop.f32.mrb[0].mxu0
    %v1737 = vpop.f32.mrb[0].mxu0
    %v1738 = vadd.f32 0.0, %v1737
    %v1739 = vpop.f32.mrb[0].mxu0
    %1740 = vmatprep.mubr.bf16.mxu0 0
    %1741 = vmatmul.mubr.bf16.gmra.mrb[0].mxu0 %v1630
    %v1742 = vpop.f32.mrb[0].mxu0
    %v1743 = vadd.f32 0.0, %v1742
    %v1744 = vpop.f32.mrb[0].mxu0
    %v1745 = vpop.f32.mrb[0].mxu0
    %v1746 = vadd.f32 0.0, %v1745
    %v1747 = vpop.f32.mrb[0].mxu0
    %1748 = vmatprep.mubr.bf16.mxu0 0
    %1749 = vmatmul.mubr.bf16.gmra.mrb[0].mxu0 %v1631
    %v1750 = vpop.f32.mrb[0].mxu0
    %v1751 = vadd.f32 0.0, %v1750
    %v1752 = vpop.f32.mrb[0].mxu0
    %v1753 = vpop.f32.mrb[0].mxu0
    %v1754 = vadd.f32 0.0, %v1753
    %v1755 = vpop.f32.mrb[0].mxu0
    %1756 = vmatprep.mubr.bf16.mxu0 0
    %1757 = vmatmul.mubr.bf16.gmra.mrb[0].mxu0 %v1632
    %v1758 = vpop.f32.mrb[0].mxu0
    %v1759 = vadd.f32 0.0, %v1758
    %v1760 = vpop.f32.mrb[0].mxu0
    %v1761 = vpop.f32.mrb[0].mxu0
    %v1762 = vadd.f32 0.0, %v1761
    %v1763 = vpop.f32.mrb[0].mxu0
    %1764 = vmatprep.mubr.bf16.mxu0 0
    %1765 = vmatmul.mubr.bf16.gmra.mrb[0].mxu0 %v1633
    %v1766 = vpop.f32.mrb[0].mxu0
    %v1767 = vadd.f32 0.0, %v1766
    %v1768 = vpop.f32.mrb[0].mxu0
    %v1769 = vpop.f32.mrb[0].mxu0
    %v1770 = vadd.f32 0.0, %v1769
    %v1771 = vpop.f32.mrb[0].mxu0
    %1772 = vmatprep.mubr.bf16.mxu0 0
    %1773 = vmatmul.mubr.bf16.gmra.mrb[0].mxu0 %v1634
    %v1774 = vpop.f32.mrb[0].mxu0
    %v1775 = vadd.f32 0.0, %v1774
    %v1776 = vpop.f32.mrb[0].mxu0
    %v1777 = vpop.f32.mrb[0].mxu0
    %v1778 = vadd.f32 0.0, %v1777
    %v1779 = vpop.f32.mrb[0].mxu0
    %1780 = vmatprep.mubr.bf16.mxu0 0
    %1781 = vmatmul.mubr.bf16.gmra.mrb[0].mxu0 %v1635
    %v1782 = vpop.f32.mrb[0].mxu0
    %v1783 = vadd.f32 0.0, %v1782
    %v1784 = vpop.f32.mrb[0].mxu0
    %v1785 = vpop.f32.mrb[0].mxu0
    %v1786 = vadd.f32 0.0, %v1785
    %v1787 = vpop.f32.mrb[0].mxu0
    %1788 = vmatprep.mubr.bf16.mxu0 0
    %1789 = vmatmul.mubr.bf16.gmra.mrb[0].mxu0 %v1636
    %v1790 = vpop.f32.mrb[0].mxu0
    %v1791 = vadd.f32 0.0, %v1790
    %v1792 = vpop.f32.mrb[0].mxu0
    %v1793 = vpop.f32.mrb[0].mxu0
    %v1794 = vadd.f32 0.0, %v1793
    %v1795 = vpop.f32.mrb[0].mxu0
    %1796 = vmatprep.mubr.bf16.mxu0 0
    %1797 = vmatmul.mubr.bf16.gmra.mrb[0].mxu0 %v1637
    %v1798 = vpop.f32.mrb[0].mxu0
    %v1799 = vadd.f32 0.0, %v1798
    %v1800 = vpop.f32.mrb[0].mxu0
    %v1801 = vpop.f32.mrb[0].mxu0
    %v1802 = vadd.f32 0.0, %v1801
    %v1803 = vpop.f32.mrb[0].mxu0
    %1804 = vmatprep.mubr.bf16.mxu0 0
    %1805 = vmatmul.mubr.bf16.gmra.mrb[0].mxu0 %v1638
    %v1806 = vpop.f32.mrb[0].mxu0
    %v1807 = vadd.f32 0.0, %v1806
    %v1808 = vpop.f32.mrb[0].mxu0
    %v1809 = vpop.f32.mrb[0].mxu0
    %v1810 = vadd.f32 0.0, %v1809
    %v1811 = vpop.f32.mrb[0].mxu0
    %1812 = vmatprep.mubr.bf16.mxu0 0
    %1813 = vmatmul.mubr.bf16.gmra.mrb[0].mxu0 %v1639
    %v1814 = vpop.f32.mrb[0].mxu0
    %v1815 = vadd.f32 0.0, %v1814
    %v1816 = vpop.f32.mrb[0].mxu0
    %v1817 = vpop.f32.mrb[0].mxu0
    %v1818 = vadd.f32 0.0, %v1817
    %v1819 = vpop.f32.mrb[0].mxu0
    %1820 = vmatprep.mubr.bf16.mxu0 0
    %1821 = vmatmul.mubr.bf16.gmra.mrb[0].mxu0 %v1640
    %v1822 = vpop.f32.mrb[0].mxu0
    %v1823 = vadd.f32 0.0, %v1822
    %v1824 = vpop.f32.mrb[0].mxu0
    %v1825 = vpop.f32.mrb[0].mxu0
    %v1826 = vadd.f32 0.0, %v1825
    %v1827 = vpop.f32.mrb[0].mxu0
    %1828 = vmatprep.mubr.bf16.mxu0 0
    %1829 = vmatmul.mubr.bf16.gmra.mrb[0].mxu0 %v1641
    %v1830 = vpop.f32.mrb[0].mxu0
    %v1831 = vadd.f32 0.0, %v1830
    %v1832 = vpop.f32.mrb[0].mxu0
    %v1833 = vpop.f32.mrb[0].mxu0
    %v1834 = vadd.f32 0.0, %v1833
    %v1835 = vpop.f32.mrb[0].mxu0
    %1836 = vmatprep.mubr.bf16.mxu0 0
    %1837 = vmatmul.mubr.bf16.gmra.mrb[0].mxu0 %v1642
    %v1838 = vpop.f32.mrb[0].mxu0
    %v1839 = vadd.f32 0.0, %v1838
    %v1840 = vpop.f32.mrb[0].mxu0
    %v1841 = vpop.f32.mrb[0].mxu0
    %v1842 = vadd.f32 0.0, %v1841
    %v1843 = vpop.f32.mrb[0].mxu0
    %1844 = vmatprep.mubr.bf16.mxu0 0
    %1845 = vmatmul.mubr.bf16.gmra.mrb[0].mxu0 %v1643
    %v1846 = vpop.f32.mrb[0].mxu0
    %v1847 = vadd.f32 0.0, %v1846
    %v1848 = vpop.f32.mrb[0].mxu0
    %v1849 = vpop.f32.mrb[0].mxu0
    %v1850 = vadd.f32 0.0, %v1849
    %v1851 = vpop.f32.mrb[0].mxu0
    %1852 = vdwg.mxu0
    %v1854 = vlaneseq
    %v1855 = vshrl.u32 %v1854, 7
    %v1856 = vsub.s32 0, %v1855
    %v1857 = vrot.slane %v1465, %v1856
    %v1859 = vmul.f32 %v1727, %v1857
    %v1860 = vmul.f32 %v1730, %v1857
    %v1861 = vmul.f32 %v1735, %v1857
    %v1862 = vmul.f32 %v1738, %v1857
    %v1863 = vmul.f32 %v1743, %v1857
    %v1864 = vmul.f32 %v1746, %v1857
    %v1865 = vmul.f32 %v1751, %v1857
    %v1866 = vmul.f32 %v1754, %v1857
    %v1867 = vmul.f32 %v1759, %v1857
    %v1868 = vmul.f32 %v1762, %v1857
    %v1869 = vmul.f32 %v1767, %v1857
    %v1870 = vmul.f32 %v1770, %v1857
    %v1871 = vmul.f32 %v1775, %v1857
    %v1872 = vmul.f32 %v1778, %v1857
    %v1873 = vmul.f32 %v1783, %v1857
    %v1874 = vmul.f32 %v1786, %v1857
    %v1875 = vmul.f32 %v1791, %v1857
    %v1876 = vmul.f32 %v1794, %v1857
    %v1877 = vmul.f32 %v1799, %v1857
    %v1878 = vmul.f32 %v1802, %v1857
    %v1879 = vmul.f32 %v1807, %v1857
    %v1880 = vmul.f32 %v1810, %v1857
    %v1881 = vmul.f32 %v1815, %v1857
    %v1882 = vmul.f32 %v1818, %v1857
    %v1883 = vmul.f32 %v1823, %v1857
    %v1884 = vmul.f32 %v1826, %v1857
    %v1885 = vmul.f32 %v1831, %v1857
    %v1886 = vmul.f32 %v1834, %v1857
    %v1887 = vmul.f32 %v1839, %v1857
    %v1888 = vmul.f32 %v1842, %v1857
    %v1889 = vmul.f32 %v1847, %v1857
    %v1890 = vmul.f32 %v1850, %v1857
    %v1892 = vlaneseq
    %v1893 = vshrl.u32 %v1892, 7
    %v1894 = vsub.s32 0, %v1893
    %v1895 = vrot.slane %v1466, %v1894
    %v1897 = vadd.f32 %v1859, %v1895
    %v1898 = vadd.f32 %v1860, %v1895
    %v1899 = vadd.f32 %v1861, %v1895
    %v1900 = vadd.f32 %v1862, %v1895
    %v1901 = vadd.f32 %v1863, %v1895
    %v1902 = vadd.f32 %v1864, %v1895
    %v1903 = vadd.f32 %v1865, %v1895
    %v1904 = vadd.f32 %v1866, %v1895
    %v1905 = vadd.f32 %v1867, %v1895
    %v1906 = vadd.f32 %v1868, %v1895
    %v1907 = vadd.f32 %v1869, %v1895
    %v1908 = vadd.f32 %v1870, %v1895
    %v1909 = vadd.f32 %v1871, %v1895
    %v1910 = vadd.f32 %v1872, %v1895
    %v1911 = vadd.f32 %v1873, %v1895
    %v1912 = vadd.f32 %v1874, %v1895
    %v1913 = vadd.f32 %v1875, %v1895
    %v1914 = vadd.f32 %v1876, %v1895
    %v1915 = vadd.f32 %v1877, %v1895
    %v1916 = vadd.f32 %v1878, %v1895
    %v1917 = vadd.f32 %v1879, %v1895
    %v1918 = vadd.f32 %v1880, %v1895
    %v1919 = vadd.f32 %v1881, %v1895
    %v1920 = vadd.f32 %v1882, %v1895
    %v1921 = vadd.f32 %v1883, %v1895
    %v1922 = vadd.f32 %v1884, %v1895
    %v1923 = vadd.f32 %v1885, %v1895
    %v1924 = vadd.f32 %v1886, %v1895
    %v1925 = vadd.f32 %v1887, %v1895
    %v1926 = vadd.f32 %v1888, %v1895
    %v1927 = vadd.f32 %v1889, %v1895
    %v1928 = vadd.f32 %v1890, %v1895
    %v1929 = vmax.f32 %v1897, 0.0
    %v1930 = vmax.f32 %v1898, 0.0
    %v1931 = vmax.f32 %v1899, 0.0
    %v1932 = vmax.f32 %v1900, 0.0
    %v1933 = vmax.f32 %v1901, 0.0
    %v1934 = vmax.f32 %v1902, 0.0
    %v1935 = vmax.f32 %v1903, 0.0
    %v1936 = vmax.f32 %v1904, 0.0
    %v1937 = vmax.f32 %v1905, 0.0
    %v1938 = vmax.f32 %v1906, 0.0
    %v1939 = vmax.f32 %v1907, 0.0
    %v1940 = vmax.f32 %v1908, 0.0
    %v1941 = vmax.f32 %v1909, 0.0
    %v1942 = vmax.f32 %v1910, 0.0
    %v1943 = vmax.f32 %v1911, 0.0
    %v1944 = vmax.f32 %v1912, 0.0
    %v1945 = vmax.f32 %v1913, 0.0
    %v1946 = vmax.f32 %v1914, 0.0
    %v1947 = vmax.f32 %v1915, 0.0
    %v1948 = vmax.f32 %v1916, 0.0
    %v1949 = vmax.f32 %v1917, 0.0
    %v1950 = vmax.f32 %v1918, 0.0
    %v1951 = vmax.f32 %v1919, 0.0
    %v1952 = vmax.f32 %v1920, 0.0
    %v1953 = vmax.f32 %v1921, 0.0
    %v1954 = vmax.f32 %v1922, 0.0
    %v1955 = vmax.f32 %v1923, 0.0
    %v1956 = vmax.f32 %v1924, 0.0
    %v1957 = vmax.f32 %v1925, 0.0
    %v1958 = vmax.f32 %v1926, 0.0
    %v1959 = vmax.f32 %v1927, 0.0
    %v1960 = vmax.f32 %v1928, 0.0
    %v1961 = vpack.c.bf16 %v1930, %v1929
    %v1962 = vpack.c.bf16 %v1932, %v1931
    %v1963 = vpack.c.bf16 %v1934, %v1933
    %v1964 = vpack.c.bf16 %v1936, %v1935
    %v1965 = vpack.c.bf16 %v1938, %v1937
    %v1966 = vpack.c.bf16 %v1940, %v1939
    %v1967 = vpack.c.bf16 %v1942, %v1941
    %v1968 = vpack.c.bf16 %v1944, %v1943
    %v1969 = vpack.c.bf16 %v1946, %v1945
    %v1970 = vpack.c.bf16 %v1948, %v1947
    %v1971 = vpack.c.bf16 %v1950, %v1949
    %v1972 = vpack.c.bf16 %v1952, %v1951
    %v1973 = vpack.c.bf16 %v1954, %v1953
    %v1974 = vpack.c.bf16 %v1956, %v1955
    %v1975 = vpack.c.bf16 %v1958, %v1957
    %v1976 = vpack.c.bf16 %v1960, %v1959
    %v1977 = vld [vmem:[#allocation4] sm:$0xf]
    %v1978 = vld [vmem:[#allocation4 + $0x4] sm:$0xf]
    %v1979 = vld [vmem:[#allocation4 + $0x8] sm:$0xf]
    %v1980 = vld [vmem:[#allocation4 + $0xc] sm:$0xf]
    %v1981 = vld [vmem:[#allocation4 + $0x10] sm:$0xf]
    %v1982 = vld [vmem:[#allocation4 + $0x14] sm:$0xf]
    %v1983 = vld [vmem:[#allocation4 + $0x18] sm:$0xf]
    %v1984 = vld [vmem:[#allocation4 + $0x1c] sm:$0xf]
    %v1985 = vld [vmem:[#allocation4 + $0x20] sm:$0xf]
    %v1986 = vld [vmem:[#allocation4 + $0x24] sm:$0xf]
    %v1987 = vld [vmem:[#allocation4 + $0x28] sm:$0xf]
    %v1988 = vld [vmem:[#allocation4 + $0x2c] sm:$0xf]
    %v1989 = vld [vmem:[#allocation4 + $0x30] sm:$0xf]
    %v1990 = vld [vmem:[#allocation4 + $0x34] sm:$0xf]
    %v1991 = vld [vmem:[#allocation4 + $0x38] sm:$0xf]
    %v1992 = vld [vmem:[#allocation4 + $0x3c] sm:$0xf]
    %v1993 = vld [vmem:[%s12] sm:$0x1]
    %v1995 = vlaneseq
    %v1996 = vshrl.u32 %v1995, 7
    %v1997 = vsub.s32 0, %v1996
    %v1998 = vrot.slane %v1993, %v1997
    %v2016 = vunpack.c.l.b16 %v1977
    %v2017 = vunpack.c.l.b16 %v1978
    %v2018 = vunpack.c.l.b16 %v1979
    %v2019 = vunpack.c.l.b16 %v1980
    %v2020 = vunpack.c.l.b16 %v1981
    %v2021 = vunpack.c.l.b16 %v1982
    %v2022 = vunpack.c.l.b16 %v1983
    %v2023 = vunpack.c.l.b16 %v1984
    %v2024 = vunpack.c.l.b16 %v1985
    %v2025 = vunpack.c.l.b16 %v1986
    %v2026 = vunpack.c.l.b16 %v1987
    %v2027 = vunpack.c.l.b16 %v1988
    %v2028 = vunpack.c.l.b16 %v1989
    %v2029 = vunpack.c.l.b16 %v1990
    %v2030 = vunpack.c.l.b16 %v1991
    %v2031 = vunpack.c.l.b16 %v1992
    %v2032 = vpack.c.b16 %v2017, %v2016
    %v2033 = vpack.c.b16 %v2019, %v2018
    %v2034 = vpack.c.b16 %v2021, %v2020
    %v2035 = vpack.c.b16 %v2023, %v2022
    %v2036 = vpack.c.b16 %v2025, %v2024
    %v2037 = vpack.c.b16 %v2027, %v2026
    %v2038 = vpack.c.b16 %v2029, %v2028
    %v2039 = vpack.c.b16 %v2031, %v2030
    %2048 = vmatprep.subr.bf16.mxu0 0
    %2049 = vmatpush1.bf16.msra.mxu0 %v2032
    %2050 = vmatprep.subr.bf16.mxu0 0
    %2051 = vmatpush1.bf16.msra.mxu0 %v2033
    %2052 = vmatprep.subr.bf16.mxu0 0
    %2053 = vmatpush1.bf16.msra.mxu0 %v2034
    %2054 = vmatprep.subr.bf16.mxu0 0
    %2055 = vmatpush1.bf16.msra.mxu0 %v2035
    %2056 = vmatprep.subr.bf16.mxu0 0
    %2057 = vmatpush1.bf16.msra.mxu0 %v2036
    %2058 = vmatprep.subr.bf16.mxu0 0
    %2059 = vmatpush1.bf16.msra.mxu0 %v2037
    %2060 = vmatprep.subr.bf16.mxu0 0
    %2061 = vmatpush1.bf16.msra.mxu0 %v2038
    %2062 = vmatprep.subr.bf16.mxu0 0
    %2063 = vmatpush1.bf16.msra.mxu0 %v2039
    %2064 = vmatprep.subr.bf16.mxu0 0
    %2065 = vmatpush1.bf16.msra.mxu0 0
    %2066 = vmatprep.subr.bf16.mxu0 0
    %2067 = vmatpush1.bf16.msra.mxu0 0
    %2068 = vmatprep.subr.bf16.mxu0 0
    %2069 = vmatpush1.bf16.msra.mxu0 0
    %2070 = vmatprep.subr.bf16.mxu0 0
    %2071 = vmatpush1.bf16.msra.mxu0 0
    %2072 = vmatprep.subr.bf16.mxu0 0
    %2073 = vmatpush1.bf16.msra.mxu0 0
    %2074 = vmatprep.subr.bf16.mxu0 0
    %2075 = vmatpush1.bf16.msra.mxu0 0
    %2076 = vmatprep.subr.bf16.mxu0 0
    %2077 = vmatpush1.bf16.msra.mxu0 0
    %2078 = vmatprep.subr.bf16.mxu0 0
    %2079 = vmatpush1.bf16.msra.mxu0 0
    %2080 = vmatprep.mubr.bf16.mxu0 0
    %2081 = vmatmul.mubr.bf16.gmra.mrb[0].mxu0 %v1961
    %v2082 = vpop.f32.mrb[0].mxu0
    %v2083 = vadd.f32 %v1998, %v2082
    %v2084 = vpop.f32.mrb[0].mxu0
    %v2085 = vpop.f32.mrb[0].mxu0
    %v2086 = vadd.f32 %v1998, %v2085
    %v2087 = vpop.f32.mrb[0].mxu0
    %2088 = vmatprep.mubr.bf16.mxu0 0
    %2089 = vmatmul.mubr.bf16.gmra.mrb[0].mxu0 %v1962
    %v2090 = vpop.f32.mrb[0].mxu0
    %v2091 = vadd.f32 %v1998, %v2090
    %v2092 = vpop.f32.mrb[0].mxu0
    %v2093 = vpop.f32.mrb[0].mxu0
    %v2094 = vadd.f32 %v1998, %v2093
    %v2095 = vpop.f32.mrb[0].mxu0
    %2096 = vmatprep.mubr.bf16.mxu0 0
    %2097 = vmatmul.mubr.bf16.gmra.mrb[0].mxu0 %v1963
    %v2098 = vpop.f32.mrb[0].mxu0
    %v2099 = vadd.f32 %v1998, %v2098
    %v2100 = vpop.f32.mrb[0].mxu0
    %v2101 = vpop.f32.mrb[0].mxu0
    %v2102 = vadd.f32 %v1998, %v2101
    %v2103 = vpop.f32.mrb[0].mxu0
    %2104 = vmatprep.mubr.bf16.mxu0 0
    %2105 = vmatmul.mubr.bf16.gmra.mrb[0].mxu0 %v1964
    %v2106 = vpop.f32.mrb[0].mxu0
    %v2107 = vadd.f32 %v1998, %v2106
    %v2108 = vpop.f32.mrb[0].mxu0
    %v2109 = vpop.f32.mrb[0].mxu0
    %v2110 = vadd.f32 %v1998, %v2109
    %v2111 = vpop.f32.mrb[0].mxu0
    %2112 = vmatprep.mubr.bf16.mxu0 0
    %2113 = vmatmul.mubr.bf16.gmra.mrb[0].mxu0 %v1965
    %v2114 = vpop.f32.mrb[0].mxu0
    %v2115 = vadd.f32 %v1998, %v2114
    %v2116 = vpop.f32.mrb[0].mxu0
    %v2117 = vpop.f32.mrb[0].mxu0
    %v2118 = vadd.f32 %v1998, %v2117
    %v2119 = vpop.f32.mrb[0].mxu0
    %2120 = vmatprep.mubr.bf16.mxu0 0
    %2121 = vmatmul.mubr.bf16.gmra.mrb[0].mxu0 %v1966
    %v2122 = vpop.f32.mrb[0].mxu0
    %v2123 = vadd.f32 %v1998, %v2122
    %v2124 = vpop.f32.mrb[0].mxu0
    %v2125 = vpop.f32.mrb[0].mxu0
    %v2126 = vadd.f32 %v1998, %v2125
    %v2127 = vpop.f32.mrb[0].mxu0
    %2128 = vmatprep.mubr.bf16.mxu0 0
    %2129 = vmatmul.mubr.bf16.gmra.mrb[0].mxu0 %v1967
    %v2130 = vpop.f32.mrb[0].mxu0
    %v2131 = vadd.f32 %v1998, %v2130
    %v2132 = vpop.f32.mrb[0].mxu0
    %v2133 = vpop.f32.mrb[0].mxu0
    %v2134 = vadd.f32 %v1998, %v2133
    %v2135 = vpop.f32.mrb[0].mxu0
    %2136 = vmatprep.mubr.bf16.mxu0 0
    %2137 = vmatmul.mubr.bf16.gmra.mrb[0].mxu0 %v1968
    %v2138 = vpop.f32.mrb[0].mxu0
    %v2139 = vadd.f32 %v1998, %v2138
    %v2140 = vpop.f32.mrb[0].mxu0
    %v2141 = vpop.f32.mrb[0].mxu0
    %v2142 = vadd.f32 %v1998, %v2141
    %v2143 = vpop.f32.mrb[0].mxu0
    %2144 = vmatprep.mubr.bf16.mxu0 0
    %2145 = vmatmul.mubr.bf16.gmra.mrb[0].mxu0 %v1969
    %v2146 = vpop.f32.mrb[0].mxu0
    %v2147 = vadd.f32 %v1998, %v2146
    %v2148 = vpop.f32.mrb[0].mxu0
    %v2149 = vpop.f32.mrb[0].mxu0
    %v2150 = vadd.f32 %v1998, %v2149
    %v2151 = vpop.f32.mrb[0].mxu0
    %2152 = vmatprep.mubr.bf16.mxu0 0
    %2153 = vmatmul.mubr.bf16.gmra.mrb[0].mxu0 %v1970
    %v2154 = vpop.f32.mrb[0].mxu0
    %v2155 = vadd.f32 %v1998, %v2154
    %v2156 = vpop.f32.mrb[0].mxu0
    %v2157 = vpop.f32.mrb[0].mxu0
    %v2158 = vadd.f32 %v1998, %v2157
    %v2159 = vpop.f32.mrb[0].mxu0
    %2160 = vmatprep.mubr.bf16.mxu0 0
    %2161 = vmatmul.mubr.bf16.gmra.mrb[0].mxu0 %v1971
    %v2162 = vpop.f32.mrb[0].mxu0
    %v2163 = vadd.f32 %v1998, %v2162
    %v2164 = vpop.f32.mrb[0].mxu0
    %v2165 = vpop.f32.mrb[0].mxu0
    %v2166 = vadd.f32 %v1998, %v2165
    %v2167 = vpop.f32.mrb[0].mxu0
    %2168 = vmatprep.mubr.bf16.mxu0 0
    %2169 = vmatmul.mubr.bf16.gmra.mrb[0].mxu0 %v1972
    %v2170 = vpop.f32.mrb[0].mxu0
    %v2171 = vadd.f32 %v1998, %v2170
    %v2172 = vpop.f32.mrb[0].mxu0
    %v2173 = vpop.f32.mrb[0].mxu0
    %v2174 = vadd.f32 %v1998, %v2173
    %v2175 = vpop.f32.mrb[0].mxu0
    %2176 = vmatprep.mubr.bf16.mxu0 0
    %2177 = vmatmul.mubr.bf16.gmra.mrb[0].mxu0 %v1973
    %v2178 = vpop.f32.mrb[0].mxu0
    %v2179 = vadd.f32 %v1998, %v2178
    %v2180 = vpop.f32.mrb[0].mxu0
    %v2181 = vpop.f32.mrb[0].mxu0
    %v2182 = vadd.f32 %v1998, %v2181
    %v2183 = vpop.f32.mrb[0].mxu0
    %2184 = vmatprep.mubr.bf16.mxu0 0
    %2185 = vmatmul.mubr.bf16.gmra.mrb[0].mxu0 %v1974
    %v2186 = vpop.f32.mrb[0].mxu0
    %v2187 = vadd.f32 %v1998, %v2186
    %v2188 = vpop.f32.mrb[0].mxu0
    %v2189 = vpop.f32.mrb[0].mxu0
    %v2190 = vadd.f32 %v1998, %v2189
    %v2191 = vpop.f32.mrb[0].mxu0
    %2192 = vmatprep.mubr.bf16.mxu0 0
    %2193 = vmatmul.mubr.bf16.gmra.mrb[0].mxu0 %v1975
    %v2194 = vpop.f32.mrb[0].mxu0
    %v2195 = vadd.f32 %v1998, %v2194
    %v2196 = vpop.f32.mrb[0].mxu0
    %v2197 = vpop.f32.mrb[0].mxu0
    %v2198 = vadd.f32 %v1998, %v2197
    %v2199 = vpop.f32.mrb[0].mxu0
    %2200 = vmatprep.mubr.bf16.mxu0 0
    %2201 = vmatmul.mubr.bf16.gmra.mrb[0].mxu0 %v1976
    %v2202 = vpop.f32.mrb[0].mxu0
    %v2203 = vadd.f32 %v1998, %v2202
    %v2204 = vpop.f32.mrb[0].mxu0
    %v2205 = vpop.f32.mrb[0].mxu0
    %v2206 = vadd.f32 %v1998, %v2205
    %v2207 = vpop.f32.mrb[0].mxu0
    %2208 = vdwg.mxu0
    %v2209 = vlaneseq
    %v2210 = vand.u32 %v2209, 127
    %vm2211 = vcmp.lt.s32.totalorder %v2210, 8
    %v2212 = vsel %vm2211, %v2083, -1e+30
    %v2213 = vsel %vm2211, %v2086, -1e+30
    %v2214 = vsel %vm2211, %v2091, -1e+30
    %v2215 = vsel %vm2211, %v2094, -1e+30
    %v2216 = vsel %vm2211, %v2099, -1e+30
    %v2217 = vsel %vm2211, %v2102, -1e+30
    %v2218 = vsel %vm2211, %v2107, -1e+30
    %v2219 = vsel %vm2211, %v2110, -1e+30
    %v2220 = vsel %vm2211, %v2115, -1e+30
    %v2221 = vsel %vm2211, %v2118, -1e+30
    %v2222 = vsel %vm2211, %v2123, -1e+30
    %v2223 = vsel %vm2211, %v2126, -1e+30
    %v2224 = vsel %vm2211, %v2131, -1e+30
    %v2225 = vsel %vm2211, %v2134, -1e+30
    %v2226 = vsel %vm2211, %v2139, -1e+30
    %v2227 = vsel %vm2211, %v2142, -1e+30
    %v2228 = vsel %vm2211, %v2147, -1e+30
    %v2229 = vsel %vm2211, %v2150, -1e+30
    %v2230 = vsel %vm2211, %v2155, -1e+30
    %v2231 = vsel %vm2211, %v2158, -1e+30
    %v2232 = vsel %vm2211, %v2163, -1e+30
    %v2233 = vsel %vm2211, %v2166, -1e+30
    %v2234 = vsel %vm2211, %v2171, -1e+30
    %v2235 = vsel %vm2211, %v2174, -1e+30
    %v2236 = vsel %vm2211, %v2179, -1e+30
    %v2237 = vsel %vm2211, %v2182, -1e+30
    %v2238 = vsel %vm2211, %v2187, -1e+30
    %v2239 = vsel %vm2211, %v2190, -1e+30
    %v2240 = vsel %vm2211, %v2195, -1e+30
    %v2241 = vsel %vm2211, %v2198, -1e+30
    %v2242 = vsel %vm2211, %v2203, -1e+30
    %v2243 = vsel %vm2211, %v2206, -1e+30
    %2244 = vmax.xlane.f32.xlu0 %v2212
    %v2245 = vpop.xlane.xlu0 %2244
    %2246 = vmax.xlane.f32.xlu0 %v2213
    %v2247 = vpop.xlane.xlu0 %2246
    %2248 = vmax.xlane.f32.xlu0 %v2214
    %v2249 = vpop.xlane.xlu0 %2248
    %2250 = vmax.xlane.f32.xlu0 %v2215
    %v2251 = vpop.xlane.xlu0 %2250
    %2252 = vmax.xlane.f32.xlu0 %v2216
    %v2253 = vpop.xlane.xlu0 %2252
    %2254 = vmax.xlane.f32.xlu0 %v2217
    %v2255 = vpop.xlane.xlu0 %2254
    %2256 = vmax.xlane.f32.xlu0 %v2218
    %v2257 = vpop.xlane.xlu0 %2256
    %2258 = vmax.xlane.f32.xlu0 %v2219
    %v2259 = vpop.xlane.xlu0 %2258
    %2260 = vmax.xlane.f32.xlu0 %v2220
    %v2261 = vpop.xlane.xlu0 %2260
    %2262 = vmax.xlane.f32.xlu0 %v2221
    %v2263 = vpop.xlane.xlu0 %2262
    %2264 = vmax.xlane.f32.xlu0 %v2222
    %v2265 = vpop.xlane.xlu0 %2264
    %2266 = vmax.xlane.f32.xlu0 %v2223
    %v2267 = vpop.xlane.xlu0 %2266
    %2268 = vmax.xlane.f32.xlu0 %v2224
    %v2269 = vpop.xlane.xlu0 %2268
    %2270 = vmax.xlane.f32.xlu0 %v2225
    %v2271 = vpop.xlane.xlu0 %2270
    %2272 = vmax.xlane.f32.xlu0 %v2226
    %v2273 = vpop.xlane.xlu0 %2272
    %2274 = vmax.xlane.f32.xlu0 %v2227
    %v2275 = vpop.xlane.xlu0 %2274
    %2276 = vmax.xlane.f32.xlu0 %v2228
    %v2277 = vpop.xlane.xlu0 %2276
    %2278 = vmax.xlane.f32.xlu0 %v2229
    %v2279 = vpop.xlane.xlu0 %2278
    %2280 = vmax.xlane.f32.xlu0 %v2230
    %v2281 = vpop.xlane.xlu0 %2280
    %2282 = vmax.xlane.f32.xlu0 %v2231
    %v2283 = vpop.xlane.xlu0 %2282
    %2284 = vmax.xlane.f32.xlu0 %v2232
    %v2285 = vpop.xlane.xlu0 %2284
    %2286 = vmax.xlane.f32.xlu0 %v2233
    %v2287 = vpop.xlane.xlu0 %2286
    %2288 = vmax.xlane.f32.xlu0 %v2234
    %v2289 = vpop.xlane.xlu0 %2288
    %2290 = vmax.xlane.f32.xlu0 %v2235
    %v2291 = vpop.xlane.xlu0 %2290
    %2292 = vmax.xlane.f32.xlu0 %v2236
    %v2293 = vpop.xlane.xlu0 %2292
    %2294 = vmax.xlane.f32.xlu0 %v2237
    %v2295 = vpop.xlane.xlu0 %2294
    %2296 = vmax.xlane.f32.xlu0 %v2238
    %v2297 = vpop.xlane.xlu0 %2296
    %2298 = vmax.xlane.f32.xlu0 %v2239
    %v2299 = vpop.xlane.xlu0 %2298
    %2300 = vmax.xlane.f32.xlu0 %v2240
    %v2301 = vpop.xlane.xlu0 %2300
    %2302 = vmax.xlane.f32.xlu0 %v2241
    %v2303 = vpop.xlane.xlu0 %2302
    %2304 = vmax.xlane.f32.xlu0 %v2242
    %v2305 = vpop.xlane.xlu0 %2304
    %2306 = vmax.xlane.f32.xlu0 %v2243
    %v2307 = vpop.xlane.xlu0 %2306
    %v2308 = vsub.f32 %v2083, %v2245
    %v2309 = vsub.f32 %v2086, %v2247
    %v2310 = vsub.f32 %v2091, %v2249
    %v2311 = vsub.f32 %v2094, %v2251
    %v2312 = vsub.f32 %v2099, %v2253
    %v2313 = vsub.f32 %v2102, %v2255
    %v2314 = vsub.f32 %v2107, %v2257
    %v2315 = vsub.f32 %v2110, %v2259
    %v2316 = vsub.f32 %v2115, %v2261
    %v2317 = vsub.f32 %v2118, %v2263
    %v2318 = vsub.f32 %v2123, %v2265
    %v2319 = vsub.f32 %v2126, %v2267
    %v2320 = vsub.f32 %v2131, %v2269
    %v2321 = vsub.f32 %v2134, %v2271
    %v2322 = vsub.f32 %v2139, %v2273
    %v2323 = vsub.f32 %v2142, %v2275
    %v2324 = vsub.f32 %v2147, %v2277
    %v2325 = vsub.f32 %v2150, %v2279
    %v2326 = vsub.f32 %v2155, %v2281
    %v2327 = vsub.f32 %v2158, %v2283
    %v2328 = vsub.f32 %v2163, %v2285
    %v2329 = vsub.f32 %v2166, %v2287
    %v2330 = vsub.f32 %v2171, %v2289
    %v2331 = vsub.f32 %v2174, %v2291
    %v2332 = vsub.f32 %v2179, %v2293
    %v2333 = vsub.f32 %v2182, %v2295
    %v2334 = vsub.f32 %v2187, %v2297
    %v2335 = vsub.f32 %v2190, %v2299
    %v2336 = vsub.f32 %v2195, %v2301
    %v2337 = vsub.f32 %v2198, %v2303
    %v2338 = vsub.f32 %v2203, %v2305
    %v2339 = vsub.f32 %v2206, %v2307
    %v2340 = vmul.f32 %v2308, 1.442695
    %v2341 = vpow.pop %v2340
    %v2342 = vmul.f32 %v2309, 1.442695
    %v2343 = vpow.pop %v2342
    %v2344 = vmul.f32 %v2310, 1.442695
    %v2345 = vpow.pop %v2344
    %v2346 = vmul.f32 %v2311, 1.442695
    %v2347 = vpow.pop %v2346
    %v2348 = vmul.f32 %v2312, 1.442695
    %v2349 = vpow.pop %v2348
    %v2350 = vmul.f32 %v2313, 1.442695
    %v2351 = vpow.pop %v2350
    %v2352 = vmul.f32 %v2314, 1.442695
    %v2353 = vpow.pop %v2352
    %v2354 = vmul.f32 %v2315, 1.442695
    %v2355 = vpow.pop %v2354
    %v2356 = vmul.f32 %v2316, 1.442695
    %v2357 = vpow.pop %v2356
    %v2358 = vmul.f32 %v2317, 1.442695
    %v2359 = vpow.pop %v2358
    %v2360 = vmul.f32 %v2318, 1.442695
    %v2361 = vpow.pop %v2360
    %v2362 = vmul.f32 %v2319, 1.442695
    %v2363 = vpow.pop %v2362
    %v2364 = vmul.f32 %v2320, 1.442695
    %v2365 = vpow.pop %v2364
    %v2366 = vmul.f32 %v2321, 1.442695
    %v2367 = vpow.pop %v2366
    %v2368 = vmul.f32 %v2322, 1.442695
    %v2369 = vpow.pop %v2368
    %v2370 = vmul.f32 %v2323, 1.442695
    %v2371 = vpow.pop %v2370
    %v2372 = vmul.f32 %v2324, 1.442695
    %v2373 = vpow.pop %v2372
    %v2374 = vmul.f32 %v2325, 1.442695
    %v2375 = vpow.pop %v2374
    %v2376 = vmul.f32 %v2326, 1.442695
    %v2377 = vpow.pop %v2376
    %v2378 = vmul.f32 %v2327, 1.442695
    %v2379 = vpow.pop %v2378
    %v2380 = vmul.f32 %v2328, 1.442695
    %v2381 = vpow.pop %v2380
    %v2382 = vmul.f32 %v2329, 1.442695
    %v2383 = vpow.pop %v2382
    %v2384 = vmul.f32 %v2330, 1.442695
    %v2385 = vpow.pop %v2384
    %v2386 = vmul.f32 %v2331, 1.442695
    %v2387 = vpow.pop %v2386
    %v2388 = vmul.f32 %v2332, 1.442695
    %v2389 = vpow.pop %v2388
    %v2390 = vmul.f32 %v2333, 1.442695
    %v2391 = vpow.pop %v2390
    %v2392 = vmul.f32 %v2334, 1.442695
    %v2393 = vpow.pop %v2392
    %v2394 = vmul.f32 %v2335, 1.442695
    %v2395 = vpow.pop %v2394
    %v2396 = vmul.f32 %v2336, 1.442695
    %v2397 = vpow.pop %v2396
    %v2398 = vmul.f32 %v2337, 1.442695
    %v2399 = vpow.pop %v2398
    %v2400 = vmul.f32 %v2338, 1.442695
    %v2401 = vpow.pop %v2400
    %v2402 = vmul.f32 %v2339, 1.442695
    %v2403 = vpow.pop %v2402
    %v2404 = vsel %vm2211, %v2341, 0.0
    %v2405 = vsel %vm2211, %v2343, 0.0
    %v2406 = vsel %vm2211, %v2345, 0.0
    %v2407 = vsel %vm2211, %v2347, 0.0
    %v2408 = vsel %vm2211, %v2349, 0.0
    %v2409 = vsel %vm2211, %v2351, 0.0
    %v2410 = vsel %vm2211, %v2353, 0.0
    %v2411 = vsel %vm2211, %v2355, 0.0
    %v2412 = vsel %vm2211, %v2357, 0.0
    %v2413 = vsel %vm2211, %v2359, 0.0
    %v2414 = vsel %vm2211, %v2361, 0.0
    %v2415 = vsel %vm2211, %v2363, 0.0
    %v2416 = vsel %vm2211, %v2365, 0.0
    %v2417 = vsel %vm2211, %v2367, 0.0
    %v2418 = vsel %vm2211, %v2369, 0.0
    %v2419 = vsel %vm2211, %v2371, 0.0
    %v2420 = vsel %vm2211, %v2373, 0.0
    %v2421 = vsel %vm2211, %v2375, 0.0
    %v2422 = vsel %vm2211, %v2377, 0.0
    %v2423 = vsel %vm2211, %v2379, 0.0
    %v2424 = vsel %vm2211, %v2381, 0.0
    %v2425 = vsel %vm2211, %v2383, 0.0
    %v2426 = vsel %vm2211, %v2385, 0.0
    %v2427 = vsel %vm2211, %v2387, 0.0
    %v2428 = vsel %vm2211, %v2389, 0.0
    %v2429 = vsel %vm2211, %v2391, 0.0
    %v2430 = vsel %vm2211, %v2393, 0.0
    %v2431 = vsel %vm2211, %v2395, 0.0
    %v2432 = vsel %vm2211, %v2397, 0.0
    %v2433 = vsel %vm2211, %v2399, 0.0
    %v2434 = vsel %vm2211, %v2401, 0.0
    %v2435 = vsel %vm2211, %v2403, 0.0
    %2436 = vadd.xlane.f32.xlu0 %v2404
    %v2437 = vpop.xlane.xlu0 %2436
    %2438 = vadd.xlane.f32.xlu0 %v2405
    %v2439 = vpop.xlane.xlu0 %2438
    %2440 = vadd.xlane.f32.xlu0 %v2406
    %v2441 = vpop.xlane.xlu0 %2440
    %2442 = vadd.xlane.f32.xlu0 %v2407
    %v2443 = vpop.xlane.xlu0 %2442
    %2444 = vadd.xlane.f32.xlu0 %v2408
    %v2445 = vpop.xlane.xlu0 %2444
    %2446 = vadd.xlane.f32.xlu0 %v2409
    %v2447 = vpop.xlane.xlu0 %2446
    %2448 = vadd.xlane.f32.xlu0 %v2410
    %v2449 = vpop.xlane.xlu0 %2448
    %2450 = vadd.xlane.f32.xlu0 %v2411
    %v2451 = vpop.xlane.xlu0 %2450
    %2452 = vadd.xlane.f32.xlu0 %v2412
    %v2453 = vpop.xlane.xlu0 %2452
    %2454 = vadd.xlane.f32.xlu0 %v2413
    %v2455 = vpop.xlane.xlu0 %2454
    %2456 = vadd.xlane.f32.xlu0 %v2414
    %v2457 = vpop.xlane.xlu0 %2456
    %2458 = vadd.xlane.f32.xlu0 %v2415
    %v2459 = vpop.xlane.xlu0 %2458
    %2460 = vadd.xlane.f32.xlu0 %v2416
    %v2461 = vpop.xlane.xlu0 %2460
    %2462 = vadd.xlane.f32.xlu0 %v2417
    %v2463 = vpop.xlane.xlu0 %2462
    %2464 = vadd.xlane.f32.xlu0 %v2418
    %v2465 = vpop.xlane.xlu0 %2464
    %2466 = vadd.xlane.f32.xlu0 %v2419
    %v2467 = vpop.xlane.xlu0 %2466
    %2468 = vadd.xlane.f32.xlu0 %v2420
    %v2469 = vpop.xlane.xlu0 %2468
    %2470 = vadd.xlane.f32.xlu0 %v2421
    %v2471 = vpop.xlane.xlu0 %2470
    %2472 = vadd.xlane.f32.xlu0 %v2422
    %v2473 = vpop.xlane.xlu0 %2472
    %2474 = vadd.xlane.f32.xlu0 %v2423
    %v2475 = vpop.xlane.xlu0 %2474
    %2476 = vadd.xlane.f32.xlu0 %v2424
    %v2477 = vpop.xlane.xlu0 %2476
    %2478 = vadd.xlane.f32.xlu0 %v2425
    %v2479 = vpop.xlane.xlu0 %2478
    %2480 = vadd.xlane.f32.xlu0 %v2426
    %v2481 = vpop.xlane.xlu0 %2480
    %2482 = vadd.xlane.f32.xlu0 %v2427
    %v2483 = vpop.xlane.xlu0 %2482
    %2484 = vadd.xlane.f32.xlu0 %v2428
    %v2485 = vpop.xlane.xlu0 %2484
    %2486 = vadd.xlane.f32.xlu0 %v2429
    %v2487 = vpop.xlane.xlu0 %2486
    %2488 = vadd.xlane.f32.xlu0 %v2430
    %v2489 = vpop.xlane.xlu0 %2488
    %2490 = vadd.xlane.f32.xlu0 %v2431
    %v2491 = vpop.xlane.xlu0 %2490
    %2492 = vadd.xlane.f32.xlu0 %v2432
    %v2493 = vpop.xlane.xlu0 %2492
    %2494 = vadd.xlane.f32.xlu0 %v2433
    %v2495 = vpop.xlane.xlu0 %2494
    %2496 = vadd.xlane.f32.xlu0 %v2434
    %v2497 = vpop.xlane.xlu0 %2496
    %2498 = vadd.xlane.f32.xlu0 %v2435
    %v2499 = vpop.xlane.xlu0 %2498
    %v2500 = vlog2.pop %v2437
    %v2501 = vmul.f32 %v2500, 0.6931472
    %v2502 = vlog2.pop %v2439
    %v2503 = vmul.f32 %v2502, 0.6931472
    %v2504 = vlog2.pop %v2441
    %v2505 = vmul.f32 %v2504, 0.6931472
    %v2506 = vlog2.pop %v2443
    %v2507 = vmul.f32 %v2506, 0.6931472
    %v2508 = vlog2.pop %v2445
    %v2509 = vmul.f32 %v2508, 0.6931472
    %v2510 = vlog2.pop %v2447
    %v2511 = vmul.f32 %v2510, 0.6931472
    %v2512 = vlog2.pop %v2449
    %v2513 = vmul.f32 %v2512, 0.6931472
    %v2514 = vlog2.pop %v2451
    %v2515 = vmul.f32 %v2514, 0.6931472
    %v2516 = vlog2.pop %v2453
    %v2517 = vmul.f32 %v2516, 0.6931472
    %v2518 = vlog2.pop %v2455
    %v2519 = vmul.f32 %v2518, 0.6931472
    %v2520 = vlog2.pop %v2457
    %v2521 = vmul.f32 %v2520, 0.6931472
    %v2522 = vlog2.pop %v2459
    %v2523 = vmul.f32 %v2522, 0.6931472
    %v2524 = vlog2.pop %v2461
    %v2525 = vmul.f32 %v2524, 0.6931472
    %v2526 = vlog2.pop %v2463
    %v2527 = vmul.f32 %v2526, 0.6931472
    %v2528 = vlog2.pop %v2465
    %v2529 = vmul.f32 %v2528, 0.6931472
    %v2530 = vlog2.pop %v2467
    %v2531 = vmul.f32 %v2530, 0.6931472
    %v2532 = vlog2.pop %v2469
    %v2533 = vmul.f32 %v2532, 0.6931472
    %v2534 = vlog2.pop %v2471
    %v2535 = vmul.f32 %v2534, 0.6931472
    %v2536 = vlog2.pop %v2473
    %v2537 = vmul.f32 %v2536, 0.6931472
    %v2538 = vlog2.pop %v2475
    %v2539 = vmul.f32 %v2538, 0.6931472
    %v2540 = vlog2.pop %v2477
    %v2541 = vmul.f32 %v2540, 0.6931472
    %v2542 = vlog2.pop %v2479
    %v2543 = vmul.f32 %v2542, 0.6931472
    %v2544 = vlog2.pop %v2481
    %v2545 = vmul.f32 %v2544, 0.6931472
    %v2546 = vlog2.pop %v2483
    %v2547 = vmul.f32 %v2546, 0.6931472
    %v2548 = vlog2.pop %v2485
    %v2549 = vmul.f32 %v2548, 0.6931472
    %v2550 = vlog2.pop %v2487
    %v2551 = vmul.f32 %v2550, 0.6931472
    %v2552 = vlog2.pop %v2489
    %v2553 = vmul.f32 %v2552, 0.6931472
    %v2554 = vlog2.pop %v2491
    %v2555 = vmul.f32 %v2554, 0.6931472
    %v2556 = vlog2.pop %v2493
    %v2557 = vmul.f32 %v2556, 0.6931472
    %v2558 = vlog2.pop %v2495
    %v2559 = vmul.f32 %v2558, 0.6931472
    %v2560 = vlog2.pop %v2497
    %v2561 = vmul.f32 %v2560, 0.6931472
    %v2562 = vlog2.pop %v2499
    %v2563 = vmul.f32 %v2562, 0.6931472
    %v2564 = vsub.f32 %v2308, %v2501
    %v2565 = vsub.f32 %v2309, %v2503
    %v2566 = vsub.f32 %v2310, %v2505
    %v2567 = vsub.f32 %v2311, %v2507
    %v2568 = vsub.f32 %v2312, %v2509
    %v2569 = vsub.f32 %v2313, %v2511
    %v2570 = vsub.f32 %v2314, %v2513
    %v2571 = vsub.f32 %v2315, %v2515
    %v2572 = vsub.f32 %v2316, %v2517
    %v2573 = vsub.f32 %v2317, %v2519
    %v2574 = vsub.f32 %v2318, %v2521
    %v2575 = vsub.f32 %v2319, %v2523
    %v2576 = vsub.f32 %v2320, %v2525
    %v2577 = vsub.f32 %v2321, %v2527
    %v2578 = vsub.f32 %v2322, %v2529
    %v2579 = vsub.f32 %v2323, %v2531
    %v2580 = vsub.f32 %v2324, %v2533
    %v2581 = vsub.f32 %v2325, %v2535
    %v2582 = vsub.f32 %v2326, %v2537
    %v2583 = vsub.f32 %v2327, %v2539
    %v2584 = vsub.f32 %v2328, %v2541
    %v2585 = vsub.f32 %v2329, %v2543
    %v2586 = vsub.f32 %v2330, %v2545
    %v2587 = vsub.f32 %v2331, %v2547
    %v2588 = vsub.f32 %v2332, %v2549
    %v2589 = vsub.f32 %v2333, %v2551
    %v2590 = vsub.f32 %v2334, %v2553
    %v2591 = vsub.f32 %v2335, %v2555
    %v2592 = vsub.f32 %v2336, %v2557
    %v2593 = vsub.f32 %v2337, %v2559
    %v2594 = vsub.f32 %v2338, %v2561
    %v2595 = vsub.f32 %v2339, %v2563
    %2596 = vst [vmem:[%s13] sm:$0xff] %v2564
    %2597 = vst [vmem:[%s13 + $0x8] sm:$0xff] %v2565
    %2598 = vst [vmem:[%s13 + $0x10] sm:$0xff] %v2566
    %2599 = vst [vmem:[%s13 + $0x18] sm:$0xff] %v2567
    %2600 = vst [vmem:[%s13 + $0x20] sm:$0xff] %v2568
    %2601 = vst [vmem:[%s13 + $0x28] sm:$0xff] %v2569
    %2602 = vst [vmem:[%s13 + $0x30] sm:$0xff] %v2570
    %2603 = vst [vmem:[%s13 + $0x38] sm:$0xff] %v2571
    %2604 = vst [vmem:[%s13 + $0x40] sm:$0xff] %v2572
    %2605 = vst [vmem:[%s13 + $0x48] sm:$0xff] %v2573
    %2606 = vst [vmem:[%s13 + $0x50] sm:$0xff] %v2574
    %2607 = vst [vmem:[%s13 + $0x58] sm:$0xff] %v2575
    %2608 = vst [vmem:[%s13 + $0x60] sm:$0xff] %v2576
    %2609 = vst [vmem:[%s13 + $0x68] sm:$0xff] %v2577
    %2610 = vst [vmem:[%s13 + $0x70] sm:$0xff] %v2578
    %2611 = vst [vmem:[%s13 + $0x78] sm:$0xff] %v2579
    %2612 = vst [vmem:[%s13 + $0x80] sm:$0xff] %v2580
    %2613 = vst [vmem:[%s13 + $0x88] sm:$0xff] %v2581
    %2614 = vst [vmem:[%s13 + $0x90] sm:$0xff] %v2582
    %2615 = vst [vmem:[%s13 + $0x98] sm:$0xff] %v2583
    %2616 = vst [vmem:[%s13 + $0xa0] sm:$0xff] %v2584
    %2617 = vst [vmem:[%s13 + $0xa8] sm:$0xff] %v2585
    %2618 = vst [vmem:[%s13 + $0xb0] sm:$0xff] %v2586
    %2619 = vst [vmem:[%s13 + $0xb8] sm:$0xff] %v2587
    %2620 = vst [vmem:[%s13 + $0xc0] sm:$0xff] %v2588
    %2621 = vst [vmem:[%s13 + $0xc8] sm:$0xff] %v2589
    %2622 = vst [vmem:[%s13 + $0xd0] sm:$0xff] %v2590
    %2623 = vst [vmem:[%s13 + $0xd8] sm:$0xff] %v2591
    %2624 = vst [vmem:[%s13 + $0xe0] sm:$0xff] %v2592
    %2625 = vst [vmem:[%s13 + $0xe8] sm:$0xff] %v2593
    %2626 = vst [vmem:[%s13 + $0xf0] sm:$0xff] %v2594
    %2627 = vst [vmem:[%s13 + $0xf8] sm:$0xff] %v2595
    // Predicated region
    $region62: #{_gin_forward_impl.1} parent=1 // pred_check
      _
    $region63: #{_gin_forward_impl.1} parent=1 // pred_check_branch
      %2629 = sbr.rel (0) target = $region65
    $region64: #{_gin_forward_impl.1} parent=1 // pred_region
      _
    $region65: #{_gin_forward_impl.1} parent=1 // pred_fallthru
      _
    // Predicated region
    $region66: #{_gin_forward_impl.1} parent=1 // pred_check
      _
    $region67: #{_gin_forward_impl.1} parent=1 // pred_check_branch
      %2631 = sbr.rel (0) target = $region69
    $region68: #{_gin_forward_impl.1} parent=1 // pred_region
      _
    $region69: #{_gin_forward_impl.1} parent=1 // pred_fallthru
      _
    %2632 = vsyncpa [#allocation3], 1
    %2633 = vsyncpa [#allocation5], 1

</llo_original>
